<compile_context>
chip_gen: v7x
topology: tpu7x:2x2x1
jax: 0.10.0
libtpu: 0.0.40
codegen_flags: <defaults>
</compile_context>

<pallas_src>
import functools
import math

import jax
import jax.numpy as jnp
from jax import lax
from jax.experimental import pallas as pl
from jax.experimental.pallas import tpu as pltpu


# ---------------------------------------------------------------------------
# Kernel 1 (standard layout, N < 128):
#   a_ref    (Bt, N, N)     adjacency
#   x_ref    (Bt, N, Din)   node features
#   w_ref    (k, Din, Dout) per-hop weights, pre-transposed (no in-kernel T)
#   bsum_ref (1, Dout)      sum of the k biases
#   o_ref    (Bt, N, Dout)  summed GCN activations (pre-BN)
#   stat_ref (1, 2, Dout)   per-grid-step [sum; sum_sq] over the node axis
# ---------------------------------------------------------------------------
def gcn_stats_kernel(a_ref, x_ref, w_ref, bsum_ref, o_ref, stat_ref, *, k, bt):
    dout = w_ref.shape[-1]
    s = jnp.zeros((1, dout), jnp.float32)
    sq = jnp.zeros((1, dout), jnp.float32)
    # bt and k are small static Python ints -> loops fully unrolled at trace
    # time (all ref indices static).
    for bb in range(bt):
        a = a_ref[bb]                                   # (N, N)
        ax = x_ref[bb]                                  # (N, Din)
        acc = None
        for kk in range(k):
            # hop-kk features == A^(kk+1) @ X  (feature propagation, no A^k)
            ax = jnp.dot(a, ax, preferred_element_type=jnp.float32)
            # per-hop projection accumulated directly (no lane-axis concat)
            pk = jnp.dot(ax, w_ref[kk], preferred_element_type=jnp.float32)
            acc = pk if acc is None else acc + pk
        out = acc + bsum_ref[...]                       # (N, Dout)
        o_ref[bb] = out.astype(o_ref.dtype)
        s = s + jnp.sum(out, axis=0, keepdims=True)
        sq = sq + jnp.sum(out * out, axis=0, keepdims=True)
    stat_ref[0] = jnp.concatenate([s, sq], axis=0)      # (2, Dout)


# ---------------------------------------------------------------------------
# Kernel 1 (transposed layout, N >= 128): everything is N lanes wide.
#   at_ref   (Bt, N, N)     A^T
#   xt_ref   (Bt, Din, N)   X^T
#   w_ref    (k, Dout, Din) original Linear weight layout (no transpose needed)
#   bsum_ref (Dout, 1)
#   o_ref    (Bt, Dout, N)
#   stat_ref (1, Dout, 2)
# ---------------------------------------------------------------------------
def gcn_stats_kernel_t(at_ref, xt_ref, w_ref, bsum_ref, o_ref, stat_ref, *, k, bt):
    dout = w_ref.shape[1]
    s = jnp.zeros((dout, 1), jnp.float32)
    sq = jnp.zeros((dout, 1), jnp.float32)
    for bb in range(bt):
        at = at_ref[bb]                                 # (N, N) = A^T
        xt = xt_ref[bb]                                 # (Din, N)
        acc = None
        for kk in range(k):
            xt = jnp.dot(xt, at, preferred_element_type=jnp.float32)       # (Din, N)
            pk = jnp.dot(w_ref[kk], xt, preferred_element_type=jnp.float32)  # (Dout, N)
            acc = pk if acc is None else acc + pk
        out = acc + bsum_ref[...]                       # (Dout, N)
        o_ref[bb] = out.astype(o_ref.dtype)
        s = s + jnp.sum(out, axis=1, keepdims=True)
        sq = sq + jnp.sum(out * out, axis=1, keepdims=True)
    stat_ref[0] = jnp.concatenate([s, sq], axis=1)      # (Dout, 2)


# ---------------------------------------------------------------------------
# Kernel 2: elementwise normalize (precomputed scale/shift) + leaky_relu.
# Works for both layouts (broadcasting handles (1,width) and (1,Dout,1)).
# ---------------------------------------------------------------------------
def bn_act_kernel(h_ref, scale_ref, shift_ref, o_ref, *, slope):
    y = h_ref[...] * scale_ref[...] + shift_ref[...]
    o_ref[...] = jnp.where(y >= 0, y, slope * y)


def _largest_divisor_fitting(n, per_item_bytes, budget_bytes):
    """Largest divisor bt of n with bt * per_item_bytes <= budget (>= 1)."""
    best = 1
    for bt in range(1, n + 1):
        if n % bt == 0 and bt * per_item_bytes <= budget_bytes:
            best = bt
    return best


# ---------------------------------------------------------------------------
# Wrapper
# ---------------------------------------------------------------------------
def mpnn_mk_v2_forward(X, A, W, b, gamma, beta, *, k, eps=1e-5, slope=0.01):
    B, N, Din = X.shape
    Dout = W.shape[1]
    f32 = jnp.float32

    # Lane-dense (transposed) propagation only pays off once the node axis
    # fills the 128-lane dimension.
    transposed = N >= 128

    # ---- fold several batches per grid step (amortize per-step overhead) ----
    per_batch_bytes = 4 * (N * N + N * Din + N * Dout)
    bt = _largest_divisor_fitting(B, per_batch_bytes, budget_bytes=12 << 20)
    G = B // bt

    b_sum = jnp.sum(b, axis=0)                          # (Dout,)

    if not transposed:
        w_k = jnp.transpose(W, (0, 2, 1))               # (k, Din, Dout)
        bsum_in = b_sum.reshape(1, Dout)
        in_arrays = (A, X, w_k, bsum_in)
        in_specs = [
            pl.BlockSpec((bt, N, N), lambda gi: (gi, 0, 0)),
            pl.BlockSpec((bt, N, Din), lambda gi: (gi, 0, 0)),
            pl.BlockSpec((k, Din, Dout), lambda gi: (0, 0, 0)),
            pl.BlockSpec((1, Dout), lambda gi: (0, 0)),
        ]
        out_shape = (
            jax.ShapeDtypeStruct((B, N, Dout), f32),
            jax.ShapeDtypeStruct((G, 2, Dout), f32),
        )
        out_specs = (
            pl.BlockSpec((bt, N, Dout), lambda gi: (gi, 0, 0)),
            pl.BlockSpec((1, 2, Dout), lambda gi: (gi, 0, 0)),
        )
        kernel1 = functools.partial(gcn_stats_kernel, k=k, bt=bt)
        weight_bytes = 4 * (k * Din * Dout + Dout)
    else:
        at = jnp.swapaxes(A, 1, 2)                      # A^T  (B, N, N)
        xt = jnp.swapaxes(X, 1, 2)                      # X^T  (B, Din, N)
        bsum_in = b_sum.reshape(Dout, 1)
        in_arrays = (at, xt, W, bsum_in)
        in_specs = [
            pl.BlockSpec((bt, N, N), lambda gi: (gi, 0, 0)),
            pl.BlockSpec((bt, Din, N), lambda gi: (gi, 0, 0)),
            pl.BlockSpec((k, Dout, Din), lambda gi: (0, 0, 0)),
            pl.BlockSpec((Dout, 1), lambda gi: (0, 0)),
        ]
        out_shape = (
            jax.ShapeDtypeStruct((B, Dout, N), f32),
            jax.ShapeDtypeStruct((G, Dout, 2), f32),
        )
        out_specs = (
            pl.BlockSpec((bt, Dout, N), lambda gi: (gi, 0, 0)),
            pl.BlockSpec((1, Dout, 2), lambda gi: (gi, 0, 0)),
        )
        kernel1 = functools.partial(gcn_stats_kernel_t, k=k, bt=bt)
        weight_bytes = 4 * (k * Dout * Din + Dout)

    # VMEM limit derived from the actual block footprint (double-buffered),
    # not a hard-coded 48 MiB: the common case stays well under v7x's 64 MiB.
    step_bytes = bt * per_batch_bytes + 4 * 2 * Dout
    vmem_limit = int(min(max(2 * step_bytes + 2 * weight_bytes + (4 << 20),
                             16 << 20), 100 << 20))

    gcn_out, stats = pl.pallas_call(
        kernel1,
        out_shape=out_shape,
        grid_spec=pltpu.PrefetchScalarGridSpec(
            num_scalar_prefetch=0,
            grid=(G,),
            in_specs=in_specs,
            out_specs=out_specs,
        ),
        compiler_params=pltpu.CompilerParams(
            dimension_semantics=("parallel",),
            vmem_limit_bytes=vmem_limit,
        ),
    )(*in_arrays)

    # ---- tiny per-channel reduction -> BN batch stats, folded into scale/shift
    cnt = jnp.float32(B * N)
    if not transposed:
        ssum = jnp.sum(stats[:, 0, :], axis=0)
        ssq = jnp.sum(stats[:, 1, :], axis=0)
    else:
        ssum = jnp.sum(stats[:, :, 0], axis=0)
        ssq = jnp.sum(stats[:, :, 1], axis=0)
    mean = ssum / cnt
    # Single-pass (biased) variance; clamp >= 0 against rounding.
    # TODO(synk): switch to a two-pass reduction if inputs can carry a large
    #             DC offset (|mean| >> std catastrophic cancellation).
    var = jnp.maximum(ssq / cnt - mean * mean, 0.0)
    scale = gamma * lax.rsqrt(var + eps)
    shift = beta - mean * scale

    bn_kernel = functools.partial(bn_act_kernel, slope=slope)

    if not transposed:
        # Lane-dense packing: fold r node rows into the lane dim so stores are
        # >=128 lanes wide; pad N to a multiple of r (no r=1 fallback).
        r = 128 // math.gcd(Dout, 128)
        n_pad = ((N + r - 1) // r) * r
        h = gcn_out
        if n_pad != N:
            h = jnp.pad(h, ((0, 0), (0, n_pad - N), (0, 0)))
        rows = n_pad // r
        width = r * Dout
        total_rows = B * rows                           # batch folded into tile axis
        h = h.reshape(total_rows, width)
        scale_p = jnp.tile(scale, r).reshape(1, width)
        shift_p = jnp.tile(shift, r).reshape(1, width)

        # ~1 MiB row tiles (tr up to 2048 at width 128): HBM-roofline regime.
        tr = min(total_rows, max(8, (1 << 20) // (width * 4)))
        if tr < total_rows:
            tr = max(8, (tr // 8) * 8)

        out2 = pl.pallas_call(
            bn_kernel,
            out_shape=jax.ShapeDtypeStruct((total_rows, width), f32),
            grid_spec=pltpu.PrefetchScalarGridSpec(
                num_scalar_prefetch=0,
                grid=(pl.cdiv(total_rows, tr),),
                in_specs=[
                    pl.BlockSpec((tr, width), lambda ti: (ti, 0)),
                    pl.BlockSpec((1, width), lambda ti: (0, 0)),
                    pl.BlockSpec((1, width), lambda ti: (0, 0)),
                ],
                out_specs=pl.BlockSpec((tr, width), lambda ti: (ti, 0)),
            ),
            compiler_params=pltpu.CompilerParams(
                dimension_semantics=("parallel",)),
        )(h, scale_p, shift_p)

        out2 = out2.reshape(B, n_pad, Dout)
        return out2[:, :N, :] if n_pad != N else out2

    else:
        # (B, Dout, N) layout is already lane-dense; scale/shift broadcast
        # over the N-lane axis.  Restore (B, N, Dout) with one cheap transpose.
        scale_t = scale.reshape(1, Dout, 1)
        shift_t = shift.reshape(1, Dout, 1)
        tn = N if Dout * N * 4 <= (4 << 20) else 1024
        out_t = pl.pallas_call(
            bn_kernel,
            out_shape=jax.ShapeDtypeStruct((B, Dout, N), f32),
            grid_spec=pltpu.PrefetchScalarGridSpec(
                num_scalar_prefetch=0,
                grid=(B, pl.cdiv(N, tn)),
                in_specs=[
                    pl.BlockSpec((1, Dout, tn), lambda bi, ti: (bi, 0, ti)),
                    pl.BlockSpec((1, Dout, 1), lambda bi, ti: (0, 0, 0)),
                    pl.BlockSpec((1, Dout, 1), lambda bi, ti: (0, 0, 0)),
                ],
                out_specs=pl.BlockSpec((1, Dout, tn), lambda bi, ti: (bi, 0, ti)),
            ),
            compiler_params=pltpu.CompilerParams(
                dimension_semantics=("parallel", "parallel")),
        )(gcn_out, scale_t, shift_t)
        return jnp.swapaxes(out_t, 1, 2)


# ---------------------------------------------------------------------------
# Pure-JAX reference (mirrors the PyTorch module exactly)
# ---------------------------------------------------------------------------
def ref_forward(X, A, W, b, gamma, beta, *, k, eps=1e-5, slope=0.01):
    A_cur = A
    acc = 0.0
    for kk in range(k):
        if kk > 0:
            A_cur = jnp.einsum("bij,bjk->bik", A_cur, A)
        out_k = jnp.einsum("bij,bjd->bid", A_cur, X) @ W[kk].T + b[kk]
        acc = acc + out_k
    mean = acc.mean(axis=(0, 1), keepdims=True)
    var = ((acc - mean) ** 2).mean(axis=(0, 1), keepdims=True)   # biased
    y = (acc - mean) / jnp.sqrt(var + eps) * gamma + beta
    return jnp.where(y >= 0, y, slope * y)


if __name__ == "__main__":
    B, N, Din, Dout, K = 2, 16, 8, 32, 3

    key = jax.random.PRNGKey(0)
    kx, ka, kw, kb = jax.random.split(key, 4)

    X = jax.random.normal(kx, (B, N, Din), dtype=jnp.float32)
    A = jax.random.normal(ka, (B, N, N), dtype=jnp.float32) * 0.1

    # Per-hop Linear weights / biases; BatchNorm1d affine at PyTorch init.
    W = jax.random.normal(kw, (K, Dout, Din), dtype=jnp.float32) * (1.0 / jnp.sqrt(Din))
    b = jax.random.normal(kb, (K, Dout), dtype=jnp.float32) * 0.01
    gamma = jnp.ones((Dout,), dtype=jnp.float32)
    beta = jnp.zeros((Dout,), dtype=jnp.float32)

    fwd = jax.jit(functools.partial(mpnn_mk_v2_forward, k=K))
    out = fwd(X, A, W, b, gamma, beta)
    out = jax.block_until_ready(out)

    ref = ref_forward(X, A, W, b, gamma, beta, k=K)
    assert out.shape == (B, N, Dout)
    assert jnp.allclose(out, ref, atol=1e-4, rtol=1e-4), "mismatch vs reference"

    print("KERNEL_OK")
</pallas_src>

<mosaic_0001>
module attributes {stable_mosaic.version = 11 : i64} {
  func.func @bn_act_kernel(%arg0: i32, %arg1: memref<8x128xf32, #tpu.memory_space<vmem>>, %arg2: memref<1x128xf32, #tpu.memory_space<vmem>>, %arg3: memref<1x128xf32, #tpu.memory_space<vmem>>, %arg4: memref<8x128xf32, #tpu.memory_space<vmem>>) attributes {dimension_semantics = [#tpu.dimension_semantics<parallel>], iteration_bounds = array<i64: 1>, scalar_prefetch = 0 : i64, scratch_operands = 0 : i64, tpu.core_type = #tpu.core_type<tc>, window_params = [{transform_indices = @transform_0, window_bounds = array<i64: 8, 128>}, {pipeline_mode = #tpu.pipeline_mode<synchronous>, transform_indices = @transform_1, window_bounds = array<i64: 1, 128>}, {pipeline_mode = #tpu.pipeline_mode<synchronous>, transform_indices = @transform_2, window_bounds = array<i64: 1, 128>}, {transform_indices = @transform_3, window_bounds = array<i64: 8, 128>}]} {
    %c0 = arith.constant 0 : index
    %c0_0 = arith.constant 0 : index
    %0 = vector.load %arg1[%c0, %c0_0] : memref<8x128xf32, #tpu.memory_space<vmem>>, vector<8x128xf32>
    %c0_1 = arith.constant 0 : index
    %c0_2 = arith.constant 0 : index
    %1 = vector.load %arg2[%c0_1, %c0_2] : memref<1x128xf32, #tpu.memory_space<vmem>>, vector<1x128xf32>
    %2 = vector.broadcast %1 : vector<1x128xf32> to vector<8x128xf32>
    %3 = arith.mulf %0, %2 : vector<8x128xf32>
    %c0_3 = arith.constant 0 : index
    %c0_4 = arith.constant 0 : index
    %4 = vector.load %arg3[%c0_3, %c0_4] : memref<1x128xf32, #tpu.memory_space<vmem>>, vector<1x128xf32>
    %5 = vector.broadcast %4 : vector<1x128xf32> to vector<8x128xf32>
    %6 = arith.addf %3, %5 : vector<8x128xf32>
    %cst = arith.constant 0.000000e+00 : f32
    %7 = vector.broadcast %cst : f32 to vector<8x128xf32>
    %8 = arith.cmpf oge, %6, %7 : vector<8x128xf32>
    %cst_5 = arith.constant 0.00999999977 : f32
    %9 = vector.broadcast %cst_5 : f32 to vector<8x128xf32>
    %10 = arith.mulf %9, %6 : vector<8x128xf32>
    %11 = arith.select %8, %6, %10 : vector<8x128xi1>, vector<8x128xf32>
    %c0_6 = arith.constant 0 : index
    %c0_7 = arith.constant 0 : index
    %12 = vector.load %arg4[%c0_6, %c0_7] : memref<8x128xf32, #tpu.memory_space<vmem>>, vector<8x128xf32>
    tpu.vector_store %arg4[%c0_6, %c0_7], %11 {strides = array<i32>} : memref<8x128xf32, #tpu.memory_space<vmem>>, vector<8x128xf32>,
    return
  }
  func.func @transform_0(%arg0: i32) -> (i32, i32) {
    %c0_i32 = arith.constant 0 : i32
    %c0_i32_0 = arith.constant 0 : i32
    return %arg0, %c0_i32 : i32, i32
  }
  func.func @transform_1(%arg0: i32) -> (i32, i32) {
    %c0_i32 = arith.constant 0 : i32
    %c0_i32_0 = arith.constant 0 : i32
    %c0_i32_1 = arith.constant 0 : i32
    return %c0_i32, %c0_i32_0 : i32, i32
  }
  func.func @transform_2(%arg0: i32) -> (i32, i32) {
    %c0_i32 = arith.constant 0 : i32
    %c0_i32_0 = arith.constant 0 : i32
    %c0_i32_1 = arith.constant 0 : i32
    return %c0_i32, %c0_i32_0 : i32, i32
  }
  func.func @transform_3(%arg0: i32) -> (i32, i32) {
    %c0_i32 = arith.constant 0 : i32
    %c0_i32_0 = arith.constant 0 : i32
    return %arg0, %c0_i32 : i32, i32
  }
}

module attributes {stable_mosaic.version = 11 : i64} {
  func.func @gcn_stats_kernel(%arg0: i32, %arg1: memref<2x16x16xf32, #tpu.memory_space<vmem>>, %arg2: memref<2x16x8xf32, #tpu.memory_space<vmem>>, %arg3: memref<3x8x32xf32, #tpu.memory_space<vmem>>, %arg4: memref<1x32xf32, #tpu.memory_space<vmem>>, %arg5: memref<2x16x32xf32, #tpu.memory_space<vmem>>, %arg6: memref<1x2x32xf32, #tpu.memory_space<vmem>>) attributes {dimension_semantics = [#tpu.dimension_semantics<parallel>], iteration_bounds = array<i64: 1>, scalar_prefetch = 0 : i64, scratch_operands = 0 : i64, tpu.core_type = #tpu.core_type<tc>, window_params = [{transform_indices = @transform_0, window_bounds = array<i64: 2, 16, 16>}, {transform_indices = @transform_1, window_bounds = array<i64: 2, 16, 8>}, {pipeline_mode = #tpu.pipeline_mode<synchronous>, transform_indices = @transform_2, window_bounds = array<i64: 3, 8, 32>}, {pipeline_mode = #tpu.pipeline_mode<synchronous>, transform_indices = @transform_3, window_bounds = array<i64: 1, 32>}, {transform_indices = @transform_4, window_bounds = array<i64: 2, 16, 32>}, {transform_indices = @transform_5, window_bounds = array<i64: 1, 2, 32>}]} {
    %cst = arith.constant 0.000000e+00 : f32
    %0 = vector.broadcast %cst : f32 to vector<1x32xf32>
    %cst_0 = arith.constant 0.000000e+00 : f32
    %1 = vector.broadcast %cst_0 : f32 to vector<1x32xf32>
    %c0 = arith.constant 0 : index
    %c0_1 = arith.constant 0 : index
    %c0_2 = arith.constant 0 : index
    %2 = vector.load %arg1[%c0, %c0_1, %c0_2] : memref<2x16x16xf32, #tpu.memory_space<vmem>>, vector<1x16x16xf32>
    %3 = vector.shape_cast %2 : vector<1x16x16xf32> to vector<16x16xf32>
    %c0_3 = arith.constant 0 : index
    %c0_4 = arith.constant 0 : index
    %c0_5 = arith.constant 0 : index
    %4 = vector.load %arg2[%c0_3, %c0_4, %c0_5] : memref<2x16x8xf32, #tpu.memory_space<vmem>>, vector<1x16x8xf32>
    %5 = vector.shape_cast %4 : vector<1x16x8xf32> to vector<16x8xf32>
    %cst_6 = arith.constant dense<0.000000e+00> : vector<16x8xf32>
    %6 = tpu.matmul %3, %5, %cst_6 {dimension_numbers = #tpu.dot_dimension_numbers<[1], [0], [0], [1], [0, 0, 1, 1], [], []>} : vector<16x16xf32>, vector<16x8xf32>, vector<16x8xf32> -> vector<16x8xf32>
    %c0_7 = arith.constant 0 : index
    %c0_8 = arith.constant 0 : index
    %c0_9 = arith.constant 0 : index
    %7 = vector.load %arg3[%c0_7, %c0_8, %c0_9] : memref<3x8x32xf32, #tpu.memory_space<vmem>>, vector<1x8x32xf32>
    %8 = vector.shape_cast %7 : vector<1x8x32xf32> to vector<8x32xf32>
    %cst_10 = arith.constant dense<0.000000e+00> : vector<16x32xf32>
    %9 = tpu.matmul %6, %8, %cst_10 {dimension_numbers = #tpu.dot_dimension_numbers<[1], [0], [0], [1], [0, 0, 1, 1], [], []>} : vector<16x8xf32>, vector<8x32xf32>, vector<16x32xf32> -> vector<16x32xf32>
    %cst_11 = arith.constant dense<0.000000e+00> : vector<16x8xf32>
    %10 = tpu.matmul %3, %6, %cst_11 {dimension_numbers = #tpu.dot_dimension_numbers<[1], [0], [0], [1], [0, 0, 1, 1], [], []>} : vector<16x16xf32>, vector<16x8xf32>, vector<16x8xf32> -> vector<16x8xf32>
    %c1 = arith.constant 1 : index
    %c0_12 = arith.constant 0 : index
    %c0_13 = arith.constant 0 : index
    %11 = vector.load %arg3[%c1, %c0_12, %c0_13] : memref<3x8x32xf32, #tpu.memory_space<vmem>>, vector<1x8x32xf32>
    %12 = vector.shape_cast %11 : vector<1x8x32xf32> to vector<8x32xf32>
    %cst_14 = arith.constant dense<0.000000e+00> : vector<16x32xf32>
    %13 = tpu.matmul %10, %12, %cst_14 {dimension_numbers = #tpu.dot_dimension_numbers<[1], [0], [0], [1], [0, 0, 1, 1], [], []>} : vector<16x8xf32>, vector<8x32xf32>, vector<16x32xf32> -> vector<16x32xf32>
    %14 = arith.addf %9, %13 : vector<16x32xf32>
    %cst_15 = arith.constant dense<0.000000e+00> : vector<16x8xf32>
    %15 = tpu.matmul %3, %10, %cst_15 {dimension_numbers = #tpu.dot_dimension_numbers<[1], [0], [0], [1], [0, 0, 1, 1], [], []>} : vector<16x16xf32>, vector<16x8xf32>, vector<16x8xf32> -> vector<16x8xf32>
    %c2 = arith.constant 2 : index
    %c0_16 = arith.constant 0 : index
    %c0_17 = arith.constant 0 : index
    %16 = vector.load %arg3[%c2, %c0_16, %c0_17] : memref<3x8x32xf32, #tpu.memory_space<vmem>>, vector<1x8x32xf32>
    %17 = vector.shape_cast %16 : vector<1x8x32xf32> to vector<8x32xf32>
    %cst_18 = arith.constant dense<0.000000e+00> : vector<16x32xf32>
    %18 = tpu.matmul %15, %17, %cst_18 {dimension_numbers = #tpu.dot_dimension_numbers<[1], [0], [0], [1], [0, 0, 1, 1], [], []>} : vector<16x8xf32>, vector<8x32xf32>, vector<16x32xf32> -> vector<16x32xf32>
    %19 = arith.addf %14, %18 : vector<16x32xf32>
    %c0_19 = arith.constant 0 : index
    %c0_20 = arith.constant 0 : index
    %20 = vector.load %arg4[%c0_19, %c0_20] : memref<1x32xf32, #tpu.memory_space<vmem>>, vector<1x32xf32>
    %21 = vector.broadcast %20 : vector<1x32xf32> to vector<16x32xf32>
    %22 = arith.addf %19, %21 : vector<16x32xf32>
    %c0_21 = arith.constant 0 : index
    %c0_22 = arith.constant 0 : index
    %c0_23 = arith.constant 0 : index
    %23 = vector.load %arg5[%c0_21, %c0_22, %c0_23] : memref<2x16x32xf32, #tpu.memory_space<vmem>>, vector<1x16x32xf32>
    %24 = vector.shape_cast %23 : vector<1x16x32xf32> to vector<16x32xf32>
    %25 = vector.shape_cast %22 : vector<16x32xf32> to vector<1x16x32xf32>
    tpu.vector_store %arg5[%c0_21, %c0_22, %c0_23], %25 {strides = array<i32>} : memref<2x16x32xf32, #tpu.memory_space<vmem>>, vector<1x16x32xf32>,
    %cst_24 = arith.constant dense<0.000000e+00> : vector<32xf32>
    %26 = vector.multi_reduction <add>, %22, %cst_24 [0] : vector<16x32xf32> to vector<32xf32>
    %27 = vector.shape_cast %26 : vector<32xf32> to vector<1x32xf32>
    %28 = arith.addf %0, %27 : vector<1x32xf32>
    %29 = arith.mulf %22, %22 : vector<16x32xf32>
    %cst_25 = arith.constant dense<0.000000e+00> : vector<32xf32>
    %30 = vector.multi_reduction <add>, %29, %cst_25 [0] : vector<16x32xf32> to vector<32xf32>
    %31 = vector.shape_cast %30 : vector<32xf32> to vector<1x32xf32>
    %32 = arith.addf %1, %31 : vector<1x32xf32>
    %c1_26 = arith.constant 1 : index
    %c0_27 = arith.constant 0 : index
    %c0_28 = arith.constant 0 : index
    %33 = vector.load %arg1[%c1_26, %c0_27, %c0_28] : memref<2x16x16xf32, #tpu.memory_space<vmem>>, vector<1x16x16xf32>
    %34 = vector.shape_cast %33 : vector<1x16x16xf32> to vector<16x16xf32>
    %c1_29 = arith.constant 1 : index
    %c0_30 = arith.constant 0 : index
    %c0_31 = arith.constant 0 : index
    %35 = vector.load %arg2[%c1_29, %c0_30, %c0_31] : memref<2x16x8xf32, #tpu.memory_space<vmem>>, vector<1x16x8xf32>
    %36 = vector.shape_cast %35 : vector<1x16x8xf32> to vector<16x8xf32>
    %cst_32 = arith.constant dense<0.000000e+00> : vector<16x8xf32>
    %37 = tpu.matmul %34, %36, %cst_32 {dimension_numbers = #tpu.dot_dimension_numbers<[1], [0], [0], [1], [0, 0, 1, 1], [], []>} : vector<16x16xf32>, vector<16x8xf32>, vector<16x8xf32> -> vector<16x8xf32>
    %c0_33 = arith.constant 0 : index
    %c0_34 = arith.constant 0 : index
    %c0_35 = arith.constant 0 : index
    %38 = vector.load %arg3[%c0_33, %c0_34, %c0_35] : memref<3x8x32xf32, #tpu.memory_space<vmem>>, vector<1x8x32xf32>
    %39 = vector.shape_cast %38 : vector<1x8x32xf32> to vector<8x32xf32>
    %cst_36 = arith.constant dense<0.000000e+00> : vector<16x32xf32>
    %40 = tpu.matmul %37, %39, %cst_36 {dimension_numbers = #tpu.dot_dimension_numbers<[1], [0], [0], [1], [0, 0, 1, 1], [], []>} : vector<16x8xf32>, vector<8x32xf32>, vector<16x32xf32> -> vector<16x32xf32>
    %cst_37 = arith.constant dense<0.000000e+00> : vector<16x8xf32>
    %41 = tpu.matmul %34, %37, %cst_37 {dimension_numbers = #tpu.dot_dimension_numbers<[1], [0], [0], [1], [0, 0, 1, 1], [], []>} : vector<16x16xf32>, vector<16x8xf32>, vector<16x8xf32> -> vector<16x8xf32>
    %c1_38 = arith.constant 1 : index
    %c0_39 = arith.constant 0 : index
    %c0_40 = arith.constant 0 : index
    %42 = vector.load %arg3[%c1_38, %c0_39, %c0_40] : memref<3x8x32xf32, #tpu.memory_space<vmem>>, vector<1x8x32xf32>
    %43 = vector.shape_cast %42 : vector<1x8x32xf32> to vector<8x32xf32>
    %cst_41 = arith.constant dense<0.000000e+00> : vector<16x32xf32>
    %44 = tpu.matmul %41, %43, %cst_41 {dimension_numbers = #tpu.dot_dimension_numbers<[1], [0], [0], [1], [0, 0, 1, 1], [], []>} : vector<16x8xf32>, vector<8x32xf32>, vector<16x32xf32> -> vector<16x32xf32>
    %45 = arith.addf %40, %44 : vector<16x32xf32>
    %cst_42 = arith.constant dense<0.000000e+00> : vector<16x8xf32>
    %46 = tpu.matmul %34, %41, %cst_42 {dimension_numbers = #tpu.dot_dimension_numbers<[1], [0], [0], [1], [0, 0, 1, 1], [], []>} : vector<16x16xf32>, vector<16x8xf32>, vector<16x8xf32> -> vector<16x8xf32>
    %c2_43 = arith.constant 2 : index
    %c0_44 = arith.constant 0 : index
    %c0_45 = arith.constant 0 : index
    %47 = vector.load %arg3[%c2_43, %c0_44, %c0_45] : memref<3x8x32xf32, #tpu.memory_space<vmem>>, vector<1x8x32xf32>
    %48 = vector.shape_cast %47 : vector<1x8x32xf32> to vector<8x32xf32>
    %cst_46 = arith.constant dense<0.000000e+00> : vector<16x32xf32>
    %49 = tpu.matmul %46, %48, %cst_46 {dimension_numbers = #tpu.dot_dimension_numbers<[1], [0], [0], [1], [0, 0, 1, 1], [], []>} : vector<16x8xf32>, vector<8x32xf32>, vector<16x32xf32> -> vector<16x32xf32>
    %50 = arith.addf %45, %49 : vector<16x32xf32>
    %c0_47 = arith.constant 0 : index
    %c0_48 = arith.constant 0 : index
    %51 = vector.load %arg4[%c0_47, %c0_48] : memref<1x32xf32, #tpu.memory_space<vmem>>, vector<1x32xf32>
    %52 = vector.broadcast %51 : vector<1x32xf32> to vector<16x32xf32>
    %53 = arith.addf %50, %52 : vector<16x32xf32>
    %c1_49 = arith.constant 1 : index
    %c0_50 = arith.constant 0 : index
    %c0_51 = arith.constant 0 : index
    %54 = vector.load %arg5[%c1_49, %c0_50, %c0_51] : memref<2x16x32xf32, #tpu.memory_space<vmem>>, vector<1x16x32xf32>
    %55 = vector.shape_cast %54 : vector<1x16x32xf32> to vector<16x32xf32>
    %56 = vector.shape_cast %53 : vector<16x32xf32> to vector<1x16x32xf32>
    tpu.vector_store %arg5[%c1_49, %c0_50, %c0_51], %56 {strides = array<i32>} : memref<2x16x32xf32, #tpu.memory_space<vmem>>, vector<1x16x32xf32>,
    %cst_52 = arith.constant dense<0.000000e+00> : vector<32xf32>
    %57 = vector.multi_reduction <add>, %53, %cst_52 [0] : vector<16x32xf32> to vector<32xf32>
    %58 = vector.shape_cast %57 : vector<32xf32> to vector<1x32xf32>
    %59 = arith.addf %28, %58 : vector<1x32xf32>
    %60 = arith.mulf %53, %53 : vector<16x32xf32>
    %cst_53 = arith.constant dense<0.000000e+00> : vector<32xf32>
    %61 = vector.multi_reduction <add>, %60, %cst_53 [0] : vector<16x32xf32> to vector<32xf32>
    %62 = vector.shape_cast %61 : vector<32xf32> to vector<1x32xf32>
    %63 = arith.addf %32, %62 : vector<1x32xf32>
    %64 = tpu.concatenate %59, %63 in 0 : vector<1x32xf32>, vector<1x32xf32> -> vector<2x32xf32>
    %c0_54 = arith.constant 0 : index
    %c0_55 = arith.constant 0 : index
    %c0_56 = arith.constant 0 : index
    %65 = vector.load %arg6[%c0_54, %c0_55, %c0_56] : memref<1x2x32xf32, #tpu.memory_space<vmem>>, vector<1x2x32xf32>
    %66 = vector.shape_cast %65 : vector<1x2x32xf32> to vector<2x32xf32>
    %67 = vector.shape_cast %64 : vector<2x32xf32> to vector<1x2x32xf32>
    tpu.vector_store %arg6[%c0_54, %c0_55, %c0_56], %67 {strides = array<i32>} : memref<1x2x32xf32, #tpu.memory_space<vmem>>, vector<1x2x32xf32>,
    return
  }
  func.func @transform_0(%arg0: i32) -> (i32, i32, i32) {
    %c0_i32 = arith.constant 0 : i32
    %c0_i32_0 = arith.constant 0 : i32
    %c0_i32_1 = arith.constant 0 : i32
    return %arg0, %c0_i32, %c0_i32_0 : i32, i32, i32
  }
  func.func @transform_1(%arg0: i32) -> (i32, i32, i32) {
    %c0_i32 = arith.constant 0 : i32
    %c0_i32_0 = arith.constant 0 : i32
    %c0_i32_1 = arith.constant 0 : i32
    return %arg0, %c0_i32, %c0_i32_0 : i32, i32, i32
  }
  func.func @transform_2(%arg0: i32) -> (i32, i32, i32) {
    %c0_i32 = arith.constant 0 : i32
    %c0_i32_0 = arith.constant 0 : i32
    %c0_i32_1 = arith.constant 0 : i32
    %c0_i32_2 = arith.constant 0 : i32
    return %c0_i32, %c0_i32_0, %c0_i32_1 : i32, i32, i32
  }
  func.func @transform_3(%arg0: i32) -> (i32, i32) {
    %c0_i32 = arith.constant 0 : i32
    %c0_i32_0 = arith.constant 0 : i32
    %c0_i32_1 = arith.constant 0 : i32
    return %c0_i32, %c0_i32_0 : i32, i32
  }
  func.func @transform_4(%arg0: i32) -> (i32, i32, i32) {
    %c0_i32 = arith.constant 0 : i32
    %c0_i32_0 = arith.constant 0 : i32
    %c0_i32_1 = arith.constant 0 : i32
    return %arg0, %c0_i32, %c0_i32_0 : i32, i32, i32
  }
  func.func @transform_5(%arg0: i32) -> (i32, i32, i32) {
    %c0_i32 = arith.constant 0 : i32
    %c0_i32_0 = arith.constant 0 : i32
    %c0_i32_1 = arith.constant 0 : i32
    return %arg0, %c0_i32, %c0_i32_0 : i32, i32, i32
  }
}

</mosaic_0001>

<llo_original>
// kernel: tile.18
$region0: #{tile.18}
  #allocation0 [shape = 's32[1]{0}', space=sflag, size = 0x4, scoped, tag = 'scoped memory for tile.18']
  %s0 = inlined_call_operand.vmem [shape: f32[32], index: 0, kind: input, shape index: {}]
  %s1 = inlined_call_operand.vmem [shape: f32[4,32], index: 1, kind: output, shape index: {}]
  // Predicated region
  $region2: #{tile.18} parent=0 // pred_check
    _
  $region3: #{tile.18} parent=0 // pred_check_branch
    %3 = sbr.rel (0) target = $region5
  $region4: #{tile.18} parent=0 // pred_region
    _
  $region5: #{tile.18} parent=0 // pred_fallthru
    _
  %v4 = vld [vmem:[%s0] ss:$0 sm:$0xff]
  %5 = vst [vmem:[%s1] sm:$0xf] %v4

// kernel: tile.19
$region0: #{tile.19}
  %s0 = inlined_call_operand.vmem [shape: f32[4,32], index: 0, kind: input, shape index: {}]
  %s1 = inlined_call_operand.vmem [shape: f32[1,128], index: 1, kind: output, shape index: {}]
  $region1: #{tile.19} parent=0
    #allocation0 [shape = 'u8[4096]{0}', space=vmem, size = 0x1000, scoped, tag = 'scoped mem for output reshape']
    #allocation1 [shape = 'u8[4096]{0}', space=vmem, size = 0x1000, scoped, tag = 'scoped mem for input reshape']
    %s3 = sshllo.u32 0, 4
    %v4 = vld [vmem:[%s0] sm:%s3]
    %5 = vst [vmem:[#allocation1] sm:%s3] %v4
    %v6 = vld [vmem:[#allocation1] sm:$0x1]
    %vm7 = vcmask 261120
    %8 = vst.msk [vmem:[#allocation0] sm:$0x1] %vm7, %v6
    %s9 = scalar_lea.vmem [#allocation1], 3
    %v10 = vld [vmem:[%s9] sm:$0x1]
    %11 = vrot.lane.b32.xlu0 %v10, 96
    %v12 = vpop.permute.xlu0 %11
    %vm13 = vcmask 1048320
    %14 = vst.msk [vmem:[#allocation0] sm:$0x1] %vm13, %v12
    %s15 = scalar_lea.vmem [#allocation1], 2
    %v16 = vld [vmem:[%s15] sm:$0x1]
    %17 = vrot.lane.b32.xlu0 %v16, 64
    %v18 = vpop.permute.xlu0 %17
    %vm19 = vcmask 785920
    %20 = vst.msk [vmem:[#allocation0] sm:$0x1] %vm19, %v18
    %s21 = scalar_lea.vmem [#allocation1], 1
    %v22 = vld [vmem:[%s21] sm:$0x1]
    %23 = vrot.lane.b32.xlu0 %v22, 32
    %v24 = vpop.permute.xlu0 %23
    %vm25 = vcmask 523520
    %26 = vst.msk [vmem:[#allocation0] sm:$0x1] %vm25, %v24
    %s28 = sshllo.u32 0, 1
    %v30 = vld [vmem:[#allocation0] sm:%s28]
    %s31 = sshllo.u32 0, 1
    %32 = vst [vmem:[%s1] sm:%s31] %v30

// kernel: mpnn_mk_v2_forward.3
$region0: #{mpnn_mk_v2_forward.3}
  #allocation0 [shape = 'u32[]', space=smem, size = 0x4, offset = 0x4, fixed_abs, tag = 'smem constant byte address 0x4 - core index']
  #allocation1 [shape = 'u32[144,128]{1,0:T(1,128)}', space=vmem, size = 0x12000, scoped, tag = 'internal scratch']
  %s0 = inlined_call_operand.vmem [shape: f32[8,128], index: 0, kind: input, shape index: {}]
  %s1 = inlined_call_operand.vmem [shape: f32[1,128], index: 1, kind: input, shape index: {}]
  %s2 = inlined_call_operand.vmem [shape: f32[1,128], index: 2, kind: input, shape index: {}]
  %s3 = inlined_call_operand.vmem [shape: f32[8,128], index: 3, kind: output, shape index: {}]
  %s4 = sld [smem:[#allocation0]]
  $region22: #{mpnn_mk_v2_forward.3} parent=0
    _
  %s6 = ssub.s32 1, %s4
  %s7 = scalar_select 0, %s6, %s4
  // Predicated region
  $region2: #{mpnn_mk_v2_forward.3} parent=0 // pred_check
    _
  $region3: #{mpnn_mk_v2_forward.3} parent=0 // pred_check_branch
    %9 = sbr.rel (0) target = $region5
  $region4: #{mpnn_mk_v2_forward.3} parent=0 // pred_region
    _
  $region5: #{mpnn_mk_v2_forward.3} parent=0 // pred_fallthru
    _
  // Predicated region
  $region6: #{mpnn_mk_v2_forward.3} parent=0 // pred_check
    _
  $region7: #{mpnn_mk_v2_forward.3} parent=0 // pred_check_branch
    %11 = sbr.rel (0) target = $region9
  $region8: #{mpnn_mk_v2_forward.3} parent=0 // pred_region
    _
  $region9: #{mpnn_mk_v2_forward.3} parent=0 // pred_fallthru
    _
  // Predicated region
  $region10: #{mpnn_mk_v2_forward.3} parent=0 // pred_check
    _
  $region11: #{mpnn_mk_v2_forward.3} parent=0 // pred_check_branch
    %13 = sbr.rel (0) target = $region13
  $region12: #{mpnn_mk_v2_forward.3} parent=0 // pred_region
    _
  $region13: #{mpnn_mk_v2_forward.3} parent=0 // pred_fallthru
    _
  %v14 = vld [vmem:[%s0] sm:$0xff]
  %v15 = vld [vmem:[%s1] sm:$0x1]
  %v17 = vlaneseq
  %v18 = vshrl.u32 %v17, 7
  %v19 = vsub.s32 0, %v18
  %v20 = vrot.slane %v15, %v19
  %v22 = vmul.f32 %v14, %v20
  %v23 = vld [vmem:[%s2] sm:$0x1]
  %v25 = vlaneseq
  %v26 = vshrl.u32 %v25, 7
  %v27 = vsub.s32 0, %v26
  %v28 = vrot.slane %v23, %v27
  %v30 = vadd.f32 %v22, %v28
  %vm31 = vcmp.ge.f32.partialorder %v30, 0.0
  %v32 = vmul.f32 %v30, 0.01
  %v33 = vsel %vm31, %v30, %v32
  %34 = vst [vmem:[%s3] sm:$0xff] %v33
  // Predicated region
  $region14: #{mpnn_mk_v2_forward.3} parent=0 // pred_check
    _
  $region15: #{mpnn_mk_v2_forward.3} parent=0 // pred_check_branch
    %36 = sbr.rel (0) target = $region17
  $region16: #{mpnn_mk_v2_forward.3} parent=0 // pred_region
    _
  $region17: #{mpnn_mk_v2_forward.3} parent=0 // pred_fallthru
    _
  // Predicated region
  $region18: #{mpnn_mk_v2_forward.3} parent=0 // pred_check
    _
  $region19: #{mpnn_mk_v2_forward.3} parent=0 // pred_check_branch
    %38 = sbr.rel (0) target = $region21
  $region20: #{mpnn_mk_v2_forward.3} parent=0 // pred_region
    _
  $region21: #{mpnn_mk_v2_forward.3} parent=0 // pred_fallthru
    _

// kernel: mpnn_mk_v2_forward.2
$region0: #{mpnn_mk_v2_forward.2}
  #allocation0 [shape = 'u32[]', space=smem, size = 0x4, offset = 0x4, fixed_abs, tag = 'smem constant byte address 0x4 - core index']
  #allocation1 [shape = 'u32[144,128]{1,0:T(1,128)}', space=vmem, size = 0x12000, scoped, tag = 'internal scratch']
  %s0 = inlined_call_operand.vmem [shape: f32[2,16,16], index: 0, kind: input, shape index: {}]
  %s1 = inlined_call_operand.vmem [shape: f32[2,16,8], index: 1, kind: input, shape index: {}]
  %s2 = inlined_call_operand.vmem [shape: f32[3,8,32], index: 2, kind: input, shape index: {}]
  %s3 = inlined_call_operand.vmem [shape: f32[1,32], index: 3, kind: input, shape index: {}]
  %s4 = inlined_call_operand.vmem [shape: f32[2,16,32], index: 4, kind: output, shape index: {0}]
  %s5 = inlined_call_operand.vmem [shape: f32[1,2,32], index: 5, kind: output, shape index: {1}]
  %6 = xla_tuple %s4, %s5
  %s7 = sld [smem:[#allocation0]]
  $region34: #{mpnn_mk_v2_forward.2} parent=0
    _
  %s9 = ssub.s32 1, %s7
  %s10 = scalar_select 0, %s9, %s7
  // Predicated region
  $region2: #{mpnn_mk_v2_forward.2} parent=0 // pred_check
    _
  $region3: #{mpnn_mk_v2_forward.2} parent=0 // pred_check_branch
    %12 = sbr.rel (0) target = $region5
  $region4: #{mpnn_mk_v2_forward.2} parent=0 // pred_region
    _
  $region5: #{mpnn_mk_v2_forward.2} parent=0 // pred_fallthru
    _
  // Predicated region
  $region6: #{mpnn_mk_v2_forward.2} parent=0 // pred_check
    _
  $region7: #{mpnn_mk_v2_forward.2} parent=0 // pred_check_branch
    %14 = sbr.rel (0) target = $region9
  $region8: #{mpnn_mk_v2_forward.2} parent=0 // pred_region
    _
  $region9: #{mpnn_mk_v2_forward.2} parent=0 // pred_fallthru
    _
  // Predicated region
  $region10: #{mpnn_mk_v2_forward.2} parent=0 // pred_check
    _
  $region11: #{mpnn_mk_v2_forward.2} parent=0 // pred_check_branch
    %16 = sbr.rel (0) target = $region13
  $region12: #{mpnn_mk_v2_forward.2} parent=0 // pred_region
    _
  $region13: #{mpnn_mk_v2_forward.2} parent=0 // pred_fallthru
    _
  // Predicated region
  $region14: #{mpnn_mk_v2_forward.2} parent=0 // pred_check
    _
  $region15: #{mpnn_mk_v2_forward.2} parent=0 // pred_check_branch
    %18 = sbr.rel (0) target = $region17
  $region16: #{mpnn_mk_v2_forward.2} parent=0 // pred_region
    _
  $region17: #{mpnn_mk_v2_forward.2} parent=0 // pred_fallthru
    _
  %v19 = vld [vmem:[%s0] sm:$0xff]
  %v20 = vld [vmem:[%s0 + $0x8] sm:$0xff]
  %v21 = vld [vmem:[%s1] sm:$0xff]
  %v22 = vld [vmem:[%s1 + $0x8] sm:$0xff]
  %vm23 = vcmask 130048
  %v25 = vsel %vm23, %v19, 0
  %v28 = vsel %vm23, %v20, 0
  %30 = vmatprep.subr.mxu0 0.0
  %31 = vmatpush1.msra.mxu0 %v21
  %32 = vmatprep.subr.mxu0 0.0
  %33 = vmatpush1.msra.mxu0 %v22
  %34 = vmatprep.subr.mxu0 0.0
  %35 = vmatpush1.msra.mxu0 0.0
  %36 = vmatprep.subr.mxu0 0.0
  %37 = vmatpush1.msra.mxu0 0.0
  %38 = vmatprep.subr.mxu0 0.0
  %39 = vmatpush1.msra.mxu0 0.0
  %40 = vmatprep.subr.mxu0 0.0
  %41 = vmatpush1.msra.mxu0 0.0
  %42 = vmatprep.subr.mxu0 0.0
  %43 = vmatpush1.msra.mxu0 0.0
  %44 = vmatprep.subr.mxu0 0.0
  %45 = vmatpush1.msra.mxu0 0.0
  %46 = vmatprep.subr.mxu0 0.0
  %47 = vmatpush1.msra.mxu0 0.0
  %48 = vmatprep.subr.mxu0 0.0
  %49 = vmatpush1.msra.mxu0 0.0
  %50 = vmatprep.subr.mxu0 0.0
  %51 = vmatpush1.msra.mxu0 0.0
  %52 = vmatprep.subr.mxu0 0.0
  %53 = vmatpush1.msra.mxu0 0.0
  %54 = vmatprep.subr.mxu0 0.0
  %55 = vmatpush1.msra.mxu0 0.0
  %56 = vmatprep.subr.mxu0 0.0
  %57 = vmatpush1.msra.mxu0 0.0
  %58 = vmatprep.subr.mxu0 0.0
  %59 = vmatpush1.msra.mxu0 0.0
  %60 = vmatprep.subr.mxu0 0.0
  %61 = vmatpush1.msra.mxu0 0.0
  %62 = vmatprep.subr.mxu0 0.0
  %63 = vmatpush1.msra.mxu0 0.0
  %64 = vmatprep.subr.mxu0 0.0
  %65 = vmatpush1.msra.mxu0 0.0
  %66 = vmatprep.subr.mxu0 0.0
  %67 = vmatpush1.msra.mxu0 0.0
  %68 = vmatprep.subr.mxu0 0.0
  %69 = vmatpush1.msra.mxu0 0.0
  %70 = vmatprep.subr.mxu0 0.0
  %71 = vmatpush1.msra.mxu0 0.0
  %72 = vmatprep.subr.mxu0 0.0
  %73 = vmatpush1.msra.mxu0 0.0
  %74 = vmatprep.subr.mxu0 0.0
  %75 = vmatpush1.msra.mxu0 0.0
  %76 = vmatprep.subr.mxu0 0.0
  %77 = vmatpush1.msra.mxu0 0.0
  %78 = vmatprep.subr.mxu0 0.0
  %79 = vmatpush1.msra.mxu0 0.0
  %80 = vmatprep.subr.mxu0 0.0
  %81 = vmatpush1.msra.mxu0 0.0
  %82 = vmatprep.subr.mxu0 0.0
  %83 = vmatpush1.msra.mxu0 0.0
  %84 = vmatprep.subr.mxu0 0.0
  %85 = vmatpush1.msra.mxu0 0.0
  %86 = vmatprep.subr.mxu0 0.0
  %87 = vmatpush1.msra.mxu0 0.0
  %88 = vmatprep.subr.mxu0 0.0
  %89 = vmatpush1.msra.mxu0 0.0
  %90 = vmatprep.subr.mxu0 0.0
  %91 = vmatpush1.msra.mxu0 0.0
  %92 = vmatprep.subr.mxu0 0.0
  %93 = vmatpush1.msra.mxu0 0.0
  %94 = vmatprep.mubr.f32.mxu0 0.0
  %95 = vmatmul.mubr.f32.gmra.mrb[0].mxu0 %v25
  %v96 = vpop.f32.mrb[0].mxu0
  %v97 = vadd.f32 0.0, %v96
  %v98 = vpop.f32.mrb[0].mxu0
  %99 = vmatprep.mubr.f32.mxu0 0.0
  %100 = vmatmul.mubr.f32.gmra.mrb[0].mxu0 %v28
  %v101 = vpop.f32.mrb[0].mxu0
  %v102 = vadd.f32 0.0, %v101
  %v103 = vpop.f32.mrb[0].mxu0
  %104 = vdwg.mxu0
  %v105 = vld [vmem:[%s2] sm:$0xff]
  %106 = vmatprep.subr.mxu0 0.0
  %107 = vmatpush1.msra.mxu0 %v97
  %108 = vmatprep.subr.mxu0 0.0
  %109 = vmatpush1.msra.mxu0 %v102
  %110 = vmatprep.subr.mxu0 0.0
  %111 = vmatpush1.msra.mxu0 0.0
  %112 = vmatprep.subr.mxu0 0.0
  %113 = vmatpush1.msra.mxu0 0.0
  %114 = vmatprep.subr.mxu0 0.0
  %115 = vmatpush1.msra.mxu0 0.0
  %116 = vmatprep.subr.mxu0 0.0
  %117 = vmatpush1.msra.mxu0 0.0
  %118 = vmatprep.subr.mxu0 0.0
  %119 = vmatpush1.msra.mxu0 0.0
  %120 = vmatprep.subr.mxu0 0.0
  %121 = vmatpush1.msra.mxu0 0.0
  %122 = vmatprep.subr.mxu0 0.0
  %123 = vmatpush1.msra.mxu0 0.0
  %124 = vmatprep.subr.mxu0 0.0
  %125 = vmatpush1.msra.mxu0 0.0
  %126 = vmatprep.subr.mxu0 0.0
  %127 = vmatpush1.msra.mxu0 0.0
  %128 = vmatprep.subr.mxu0 0.0
  %129 = vmatpush1.msra.mxu0 0.0
  %130 = vmatprep.subr.mxu0 0.0
  %131 = vmatpush1.msra.mxu0 0.0
  %132 = vmatprep.subr.mxu0 0.0
  %133 = vmatpush1.msra.mxu0 0.0
  %134 = vmatprep.subr.mxu0 0.0
  %135 = vmatpush1.msra.mxu0 0.0
  %136 = vmatprep.subr.mxu0 0.0
  %137 = vmatpush1.msra.mxu0 0.0
  %138 = vmatprep.subr.mxu0 0.0
  %139 = vmatpush1.msra.mxu0 0.0
  %140 = vmatprep.subr.mxu0 0.0
  %141 = vmatpush1.msra.mxu0 0.0
  %142 = vmatprep.subr.mxu0 0.0
  %143 = vmatpush1.msra.mxu0 0.0
  %144 = vmatprep.subr.mxu0 0.0
  %145 = vmatpush1.msra.mxu0 0.0
  %146 = vmatprep.subr.mxu0 0.0
  %147 = vmatpush1.msra.mxu0 0.0
  %148 = vmatprep.subr.mxu0 0.0
  %149 = vmatpush1.msra.mxu0 0.0
  %150 = vmatprep.subr.mxu0 0.0
  %151 = vmatpush1.msra.mxu0 0.0
  %152 = vmatprep.subr.mxu0 0.0
  %153 = vmatpush1.msra.mxu0 0.0
  %154 = vmatprep.subr.mxu0 0.0
  %155 = vmatpush1.msra.mxu0 0.0
  %156 = vmatprep.subr.mxu0 0.0
  %157 = vmatpush1.msra.mxu0 0.0
  %158 = vmatprep.subr.mxu0 0.0
  %159 = vmatpush1.msra.mxu0 0.0
  %160 = vmatprep.subr.mxu0 0.0
  %161 = vmatpush1.msra.mxu0 0.0
  %162 = vmatprep.subr.mxu0 0.0
  %163 = vmatpush1.msra.mxu0 0.0
  %164 = vmatprep.subr.mxu0 0.0
  %165 = vmatpush1.msra.mxu0 0.0
  %166 = vmatprep.subr.mxu0 0.0
  %167 = vmatpush1.msra.mxu0 0.0
  %168 = vmatprep.subr.mxu0 0.0
  %169 = vmatpush1.msra.mxu0 0.0
  %170 = vmatprep.mubr.f32.mxu0 0.0
  %171 = vmatmul.mubr.f32.gmra.mrb[0].mxu0 %v25
  %v172 = vpop.f32.mrb[0].mxu0
  %v173 = vadd.f32 0.0, %v172
  %v174 = vpop.f32.mrb[0].mxu0
  %175 = vmatprep.mubr.f32.mxu0 0.0
  %176 = vmatmul.mubr.f32.gmra.mrb[0].mxu0 %v28
  %v177 = vpop.f32.mrb[0].mxu0
  %v178 = vadd.f32 0.0, %v177
  %v179 = vpop.f32.mrb[0].mxu0
  %180 = vdwg.mxu0
  %s181 = scalar_lea.vmem %s2, 8
  %v182 = vld [vmem:[%s181] sm:$0xff]
  %vm183 = vcmask 64512
  %v185 = vsel %vm183, %v173, 0
  %v188 = vsel %vm183, %v178, 0
  %190 = vmatprep.subr.mxu0 0.0
  %191 = vmatpush1.msra.mxu0 %v182
  %192 = vmatprep.subr.mxu0 0.0
  %193 = vmatpush1.msra.mxu0 0.0
  %194 = vmatprep.subr.mxu0 0.0
  %195 = vmatpush1.msra.mxu0 0.0
  %196 = vmatprep.subr.mxu0 0.0
  %197 = vmatpush1.msra.mxu0 0.0
  %198 = vmatprep.subr.mxu0 0.0
  %199 = vmatpush1.msra.mxu0 0.0
  %200 = vmatprep.subr.mxu0 0.0
  %201 = vmatpush1.msra.mxu0 0.0
  %202 = vmatprep.subr.mxu0 0.0
  %203 = vmatpush1.msra.mxu0 0.0
  %204 = vmatprep.subr.mxu0 0.0
  %205 = vmatpush1.msra.mxu0 0.0
  %206 = vmatprep.subr.mxu0 0.0
  %207 = vmatpush1.msra.mxu0 0.0
  %208 = vmatprep.subr.mxu0 0.0
  %209 = vmatpush1.msra.mxu0 0.0
  %210 = vmatprep.subr.mxu0 0.0
  %211 = vmatpush1.msra.mxu0 0.0
  %212 = vmatprep.subr.mxu0 0.0
  %213 = vmatpush1.msra.mxu0 0.0
  %214 = vmatprep.subr.mxu0 0.0
  %215 = vmatpush1.msra.mxu0 0.0
  %216 = vmatprep.subr.mxu0 0.0
  %217 = vmatpush1.msra.mxu0 0.0
  %218 = vmatprep.subr.mxu0 0.0
  %219 = vmatpush1.msra.mxu0 0.0
  %220 = vmatprep.subr.mxu0 0.0
  %221 = vmatpush1.msra.mxu0 0.0
  %222 = vmatprep.subr.mxu0 0.0
  %223 = vmatpush1.msra.mxu0 0.0
  %224 = vmatprep.subr.mxu0 0.0
  %225 = vmatpush1.msra.mxu0 0.0
  %226 = vmatprep.subr.mxu0 0.0
  %227 = vmatpush1.msra.mxu0 0.0
  %228 = vmatprep.subr.mxu0 0.0
  %229 = vmatpush1.msra.mxu0 0.0
  %230 = vmatprep.subr.mxu0 0.0
  %231 = vmatpush1.msra.mxu0 0.0
  %232 = vmatprep.subr.mxu0 0.0
  %233 = vmatpush1.msra.mxu0 0.0
  %234 = vmatprep.subr.mxu0 0.0
  %235 = vmatpush1.msra.mxu0 0.0
  %236 = vmatprep.subr.mxu0 0.0
  %237 = vmatpush1.msra.mxu0 0.0
  %238 = vmatprep.subr.mxu0 0.0
  %239 = vmatpush1.msra.mxu0 0.0
  %240 = vmatprep.subr.mxu0 0.0
  %241 = vmatpush1.msra.mxu0 0.0
  %242 = vmatprep.subr.mxu0 0.0
  %243 = vmatpush1.msra.mxu0 0.0
  %244 = vmatprep.subr.mxu0 0.0
  %245 = vmatpush1.msra.mxu0 0.0
  %246 = vmatprep.subr.mxu0 0.0
  %247 = vmatpush1.msra.mxu0 0.0
  %248 = vmatprep.subr.mxu0 0.0
  %249 = vmatpush1.msra.mxu0 0.0
  %250 = vmatprep.subr.mxu0 0.0
  %251 = vmatpush1.msra.mxu0 0.0
  %252 = vmatprep.subr.mxu0 0.0
  %253 = vmatpush1.msra.mxu0 0.0
  %254 = vmatprep.mubr.f32.mxu0 0.0
  %255 = vmatmul.mubr.f32.gmra.mrb[0].mxu0 %v185
  %v256 = vpop.f32.mrb[0].mxu0
  %v257 = vadd.f32 0.0, %v256
  %v258 = vpop.f32.mrb[0].mxu0
  %259 = vmatprep.mubr.f32.mxu0 0.0
  %260 = vmatmul.mubr.f32.gmra.mrb[0].mxu0 %v188
  %v261 = vpop.f32.mrb[0].mxu0
  %v262 = vadd.f32 0.0, %v261
  %v263 = vpop.f32.mrb[0].mxu0
  %264 = vdwg.mxu0
  %v266 = vsel %vm183, %v97, 0
  %v269 = vsel %vm183, %v102, 0
  %271 = vmatprep.subr.mxu0 0.0
  %272 = vmatpush1.msra.mxu0 %v105
  %273 = vmatprep.subr.mxu0 0.0
  %274 = vmatpush1.msra.mxu0 0.0
  %275 = vmatprep.subr.mxu0 0.0
  %276 = vmatpush1.msra.mxu0 0.0
  %277 = vmatprep.subr.mxu0 0.0
  %278 = vmatpush1.msra.mxu0 0.0
  %279 = vmatprep.subr.mxu0 0.0
  %280 = vmatpush1.msra.mxu0 0.0
  %281 = vmatprep.subr.mxu0 0.0
  %282 = vmatpush1.msra.mxu0 0.0
  %283 = vmatprep.subr.mxu0 0.0
  %284 = vmatpush1.msra.mxu0 0.0
  %285 = vmatprep.subr.mxu0 0.0
  %286 = vmatpush1.msra.mxu0 0.0
  %287 = vmatprep.subr.mxu0 0.0
  %288 = vmatpush1.msra.mxu0 0.0
  %289 = vmatprep.subr.mxu0 0.0
  %290 = vmatpush1.msra.mxu0 0.0
  %291 = vmatprep.subr.mxu0 0.0
  %292 = vmatpush1.msra.mxu0 0.0
  %293 = vmatprep.subr.mxu0 0.0
  %294 = vmatpush1.msra.mxu0 0.0
  %295 = vmatprep.subr.mxu0 0.0
  %296 = vmatpush1.msra.mxu0 0.0
  %297 = vmatprep.subr.mxu0 0.0
  %298 = vmatpush1.msra.mxu0 0.0
  %299 = vmatprep.subr.mxu0 0.0
  %300 = vmatpush1.msra.mxu0 0.0
  %301 = vmatprep.subr.mxu0 0.0
  %302 = vmatpush1.msra.mxu0 0.0
  %303 = vmatprep.subr.mxu0 0.0
  %304 = vmatpush1.msra.mxu0 0.0
  %305 = vmatprep.subr.mxu0 0.0
  %306 = vmatpush1.msra.mxu0 0.0
  %307 = vmatprep.subr.mxu0 0.0
  %308 = vmatpush1.msra.mxu0 0.0
  %309 = vmatprep.subr.mxu0 0.0
  %310 = vmatpush1.msra.mxu0 0.0
  %311 = vmatprep.subr.mxu0 0.0
  %312 = vmatpush1.msra.mxu0 0.0
  %313 = vmatprep.subr.mxu0 0.0
  %314 = vmatpush1.msra.mxu0 0.0
  %315 = vmatprep.subr.mxu0 0.0
  %316 = vmatpush1.msra.mxu0 0.0
  %317 = vmatprep.subr.mxu0 0.0
  %318 = vmatpush1.msra.mxu0 0.0
  %319 = vmatprep.subr.mxu0 0.0
  %320 = vmatpush1.msra.mxu0 0.0
  %321 = vmatprep.subr.mxu0 0.0
  %322 = vmatpush1.msra.mxu0 0.0
  %323 = vmatprep.subr.mxu0 0.0
  %324 = vmatpush1.msra.mxu0 0.0
  %325 = vmatprep.subr.mxu0 0.0
  %326 = vmatpush1.msra.mxu0 0.0
  %327 = vmatprep.subr.mxu0 0.0
  %328 = vmatpush1.msra.mxu0 0.0
  %329 = vmatprep.subr.mxu0 0.0
  %330 = vmatpush1.msra.mxu0 0.0
  %331 = vmatprep.subr.mxu0 0.0
  %332 = vmatpush1.msra.mxu0 0.0
  %333 = vmatprep.subr.mxu0 0.0
  %334 = vmatpush1.msra.mxu0 0.0
  %335 = vmatprep.mubr.f32.mxu0 0.0
  %336 = vmatmul.mubr.f32.gmra.mrb[0].mxu0 %v266
  %v337 = vpop.f32.mrb[0].mxu0
  %v338 = vadd.f32 %v257, %v337
  %v339 = vpop.f32.mrb[0].mxu0
  %340 = vmatprep.mubr.f32.mxu0 0.0
  %341 = vmatmul.mubr.f32.gmra.mrb[0].mxu0 %v269
  %v342 = vpop.f32.mrb[0].mxu0
  %v343 = vadd.f32 %v262, %v342
  %v344 = vpop.f32.mrb[0].mxu0
  %345 = vdwg.mxu0
  %346 = vmatprep.subr.mxu0 0.0
  %347 = vmatpush1.msra.mxu0 %v173
  %348 = vmatprep.subr.mxu0 0.0
  %349 = vmatpush1.msra.mxu0 %v178
  %350 = vmatprep.subr.mxu0 0.0
  %351 = vmatpush1.msra.mxu0 0.0
  %352 = vmatprep.subr.mxu0 0.0
  %353 = vmatpush1.msra.mxu0 0.0
  %354 = vmatprep.subr.mxu0 0.0
  %355 = vmatpush1.msra.mxu0 0.0
  %356 = vmatprep.subr.mxu0 0.0
  %357 = vmatpush1.msra.mxu0 0.0
  %358 = vmatprep.subr.mxu0 0.0
  %359 = vmatpush1.msra.mxu0 0.0
  %360 = vmatprep.subr.mxu0 0.0
  %361 = vmatpush1.msra.mxu0 0.0
  %362 = vmatprep.subr.mxu0 0.0
  %363 = vmatpush1.msra.mxu0 0.0
  %364 = vmatprep.subr.mxu0 0.0
  %365 = vmatpush1.msra.mxu0 0.0
  %366 = vmatprep.subr.mxu0 0.0
  %367 = vmatpush1.msra.mxu0 0.0
  %368 = vmatprep.subr.mxu0 0.0
  %369 = vmatpush1.msra.mxu0 0.0
  %370 = vmatprep.subr.mxu0 0.0
  %371 = vmatpush1.msra.mxu0 0.0
  %372 = vmatprep.subr.mxu0 0.0
  %373 = vmatpush1.msra.mxu0 0.0
  %374 = vmatprep.subr.mxu0 0.0
  %375 = vmatpush1.msra.mxu0 0.0
  %376 = vmatprep.subr.mxu0 0.0
  %377 = vmatpush1.msra.mxu0 0.0
  %378 = vmatprep.subr.mxu0 0.0
  %379 = vmatpush1.msra.mxu0 0.0
  %380 = vmatprep.subr.mxu0 0.0
  %381 = vmatpush1.msra.mxu0 0.0
  %382 = vmatprep.subr.mxu0 0.0
  %383 = vmatpush1.msra.mxu0 0.0
  %384 = vmatprep.subr.mxu0 0.0
  %385 = vmatpush1.msra.mxu0 0.0
  %386 = vmatprep.subr.mxu0 0.0
  %387 = vmatpush1.msra.mxu0 0.0
  %388 = vmatprep.subr.mxu0 0.0
  %389 = vmatpush1.msra.mxu0 0.0
  %390 = vmatprep.subr.mxu0 0.0
  %391 = vmatpush1.msra.mxu0 0.0
  %392 = vmatprep.subr.mxu0 0.0
  %393 = vmatpush1.msra.mxu0 0.0
  %394 = vmatprep.subr.mxu0 0.0
  %395 = vmatpush1.msra.mxu0 0.0
  %396 = vmatprep.subr.mxu0 0.0
  %397 = vmatpush1.msra.mxu0 0.0
  %398 = vmatprep.subr.mxu0 0.0
  %399 = vmatpush1.msra.mxu0 0.0
  %400 = vmatprep.subr.mxu0 0.0
  %401 = vmatpush1.msra.mxu0 0.0
  %402 = vmatprep.subr.mxu0 0.0
  %403 = vmatpush1.msra.mxu0 0.0
  %404 = vmatprep.subr.mxu0 0.0
  %405 = vmatpush1.msra.mxu0 0.0
  %406 = vmatprep.subr.mxu0 0.0
  %407 = vmatpush1.msra.mxu0 0.0
  %408 = vmatprep.subr.mxu0 0.0
  %409 = vmatpush1.msra.mxu0 0.0
  %410 = vmatprep.mubr.f32.mxu0 0.0
  %411 = vmatmul.mubr.f32.gmra.mrb[0].mxu0 %v25
  %v412 = vpop.f32.mrb[0].mxu0
  %v413 = vadd.f32 0.0, %v412
  %v414 = vpop.f32.mrb[0].mxu0
  %415 = vmatprep.mubr.f32.mxu0 0.0
  %416 = vmatmul.mubr.f32.gmra.mrb[0].mxu0 %v28
  %v417 = vpop.f32.mrb[0].mxu0
  %v418 = vadd.f32 0.0, %v417
  %v419 = vpop.f32.mrb[0].mxu0
  %420 = vdwg.mxu0
  %s421 = scalar_lea.vmem %s2, 16
  %v422 = vld [vmem:[%s421] sm:$0xff]
  %v424 = vsel %vm183, %v413, 0
  %v427 = vsel %vm183, %v418, 0
  %429 = vmatprep.subr.mxu0 0.0
  %430 = vmatpush1.msra.mxu0 %v422
  %431 = vmatprep.subr.mxu0 0.0
  %432 = vmatpush1.msra.mxu0 0.0
  %433 = vmatprep.subr.mxu0 0.0
  %434 = vmatpush1.msra.mxu0 0.0
  %435 = vmatprep.subr.mxu0 0.0
  %436 = vmatpush1.msra.mxu0 0.0
  %437 = vmatprep.subr.mxu0 0.0
  %438 = vmatpush1.msra.mxu0 0.0
  %439 = vmatprep.subr.mxu0 0.0
  %440 = vmatpush1.msra.mxu0 0.0
  %441 = vmatprep.subr.mxu0 0.0
  %442 = vmatpush1.msra.mxu0 0.0
  %443 = vmatprep.subr.mxu0 0.0
  %444 = vmatpush1.msra.mxu0 0.0
  %445 = vmatprep.subr.mxu0 0.0
  %446 = vmatpush1.msra.mxu0 0.0
  %447 = vmatprep.subr.mxu0 0.0
  %448 = vmatpush1.msra.mxu0 0.0
  %449 = vmatprep.subr.mxu0 0.0
  %450 = vmatpush1.msra.mxu0 0.0
  %451 = vmatprep.subr.mxu0 0.0
  %452 = vmatpush1.msra.mxu0 0.0
  %453 = vmatprep.subr.mxu0 0.0
  %454 = vmatpush1.msra.mxu0 0.0
  %455 = vmatprep.subr.mxu0 0.0
  %456 = vmatpush1.msra.mxu0 0.0
  %457 = vmatprep.subr.mxu0 0.0
  %458 = vmatpush1.msra.mxu0 0.0
  %459 = vmatprep.subr.mxu0 0.0
  %460 = vmatpush1.msra.mxu0 0.0
  %461 = vmatprep.subr.mxu0 0.0
  %462 = vmatpush1.msra.mxu0 0.0
  %463 = vmatprep.subr.mxu0 0.0
  %464 = vmatpush1.msra.mxu0 0.0
  %465 = vmatprep.subr.mxu0 0.0
  %466 = vmatpush1.msra.mxu0 0.0
  %467 = vmatprep.subr.mxu0 0.0
  %468 = vmatpush1.msra.mxu0 0.0
  %469 = vmatprep.subr.mxu0 0.0
  %470 = vmatpush1.msra.mxu0 0.0
  %471 = vmatprep.subr.mxu0 0.0
  %472 = vmatpush1.msra.mxu0 0.0
  %473 = vmatprep.subr.mxu0 0.0
  %474 = vmatpush1.msra.mxu0 0.0
  %475 = vmatprep.subr.mxu0 0.0
  %476 = vmatpush1.msra.mxu0 0.0
  %477 = vmatprep.subr.mxu0 0.0
  %478 = vmatpush1.msra.mxu0 0.0
  %479 = vmatprep.subr.mxu0 0.0
  %480 = vmatpush1.msra.mxu0 0.0
  %481 = vmatprep.subr.mxu0 0.0
  %482 = vmatpush1.msra.mxu0 0.0
  %483 = vmatprep.subr.mxu0 0.0
  %484 = vmatpush1.msra.mxu0 0.0
  %485 = vmatprep.subr.mxu0 0.0
  %486 = vmatpush1.msra.mxu0 0.0
  %487 = vmatprep.subr.mxu0 0.0
  %488 = vmatpush1.msra.mxu0 0.0
  %489 = vmatprep.subr.mxu0 0.0
  %490 = vmatpush1.msra.mxu0 0.0
  %491 = vmatprep.subr.mxu0 0.0
  %492 = vmatpush1.msra.mxu0 0.0
  %493 = vmatprep.mubr.f32.mxu0 0.0
  %494 = vmatmul.mubr.f32.gmra.mrb[0].mxu0 %v424
  %v495 = vpop.f32.mrb[0].mxu0
  %v496 = vadd.f32 0.0, %v495
  %v497 = vpop.f32.mrb[0].mxu0
  %498 = vmatprep.mubr.f32.mxu0 0.0
  %499 = vmatmul.mubr.f32.gmra.mrb[0].mxu0 %v427
  %v500 = vpop.f32.mrb[0].mxu0
  %v501 = vadd.f32 0.0, %v500
  %v502 = vpop.f32.mrb[0].mxu0
  %503 = vdwg.mxu0
  %v504 = vadd.f32 %v338, %v496
  %v505 = vadd.f32 %v343, %v501
  %v506 = vld [vmem:[%s3] sm:$0x1]
  %v508 = vlaneseq
  %v509 = vshrl.u32 %v508, 7
  %v510 = vsub.s32 0, %v509
  %v511 = vrot.slane %v506, %v510
  %v513 = vadd.f32 %v504, %v511
  %v514 = vadd.f32 %v505, %v511
  %vm515 = vcmask 261120
  %516 = vst.msk [vmem:[%s4] sm:$0xff] %vm515, %v513
  %517 = vst.msk [vmem:[%s4 + $0x8] sm:$0xff] %vm515, %v514
  %v518 = vsel %vm515, %v513, 0.0
  %v519 = vsel %vm515, %v514, 0.0
  %v520 = vadd.f32 %v518, %v519
  %v521 = vrot.slane %v520, 4
  %v522 = vadd.f32 %v520, %v521
  %v523 = vrot.slane %v522, 2
  %v524 = vadd.f32 %v522, %v523
  %v525 = vrot.slane %v524, 1
  %v526 = vadd.f32 %v524, %v525
  %v527 = vadd.f32 %v526, 0.0
  %v528 = vmul.f32 %v513, %v513
  %v529 = vmul.f32 %v514, %v514
  %v530 = vsel %vm515, %v528, 0.0
  %v531 = vsel %vm515, %v529, 0.0
  %v532 = vadd.f32 %v530, %v531
  %v533 = vrot.slane %v532, 4
  %v534 = vadd.f32 %v532, %v533
  %v535 = vrot.slane %v534, 2
  %v536 = vadd.f32 %v534, %v535
  %v537 = vrot.slane %v536, 1
  %v538 = vadd.f32 %v536, %v537
  %v539 = vadd.f32 %v538, 0.0
  %s540 = scalar_lea.vmem %s0, 16
  %v541 = vld [vmem:[%s540] sm:$0xff]
  %v542 = vld [vmem:[%s540 + $0x8] sm:$0xff]
  %s543 = scalar_lea.vmem %s1, 16
  %v544 = vld [vmem:[%s543] sm:$0xff]
  %v545 = vld [vmem:[%s543 + $0x8] sm:$0xff]
  %v547 = vsel %vm23, %v541, 0
  %v550 = vsel %vm23, %v542, 0
  %552 = vmatprep.subr.mxu0 0.0
  %553 = vmatpush1.msra.mxu0 %v544
  %554 = vmatprep.subr.mxu0 0.0
  %555 = vmatpush1.msra.mxu0 %v545
  %556 = vmatprep.subr.mxu0 0.0
  %557 = vmatpush1.msra.mxu0 0.0
  %558 = vmatprep.subr.mxu0 0.0
  %559 = vmatpush1.msra.mxu0 0.0
  %560 = vmatprep.subr.mxu0 0.0
  %561 = vmatpush1.msra.mxu0 0.0
  %562 = vmatprep.subr.mxu0 0.0
  %563 = vmatpush1.msra.mxu0 0.0
  %564 = vmatprep.subr.mxu0 0.0
  %565 = vmatpush1.msra.mxu0 0.0
  %566 = vmatprep.subr.mxu0 0.0
  %567 = vmatpush1.msra.mxu0 0.0
  %568 = vmatprep.subr.mxu0 0.0
  %569 = vmatpush1.msra.mxu0 0.0
  %570 = vmatprep.subr.mxu0 0.0
  %571 = vmatpush1.msra.mxu0 0.0
  %572 = vmatprep.subr.mxu0 0.0
  %573 = vmatpush1.msra.mxu0 0.0
  %574 = vmatprep.subr.mxu0 0.0
  %575 = vmatpush1.msra.mxu0 0.0
  %576 = vmatprep.subr.mxu0 0.0
  %577 = vmatpush1.msra.mxu0 0.0
  %578 = vmatprep.subr.mxu0 0.0
  %579 = vmatpush1.msra.mxu0 0.0
  %580 = vmatprep.subr.mxu0 0.0
  %581 = vmatpush1.msra.mxu0 0.0
  %582 = vmatprep.subr.mxu0 0.0
  %583 = vmatpush1.msra.mxu0 0.0
  %584 = vmatprep.subr.mxu0 0.0
  %585 = vmatpush1.msra.mxu0 0.0
  %586 = vmatprep.subr.mxu0 0.0
  %587 = vmatpush1.msra.mxu0 0.0
  %588 = vmatprep.subr.mxu0 0.0
  %589 = vmatpush1.msra.mxu0 0.0
  %590 = vmatprep.subr.mxu0 0.0
  %591 = vmatpush1.msra.mxu0 0.0
  %592 = vmatprep.subr.mxu0 0.0
  %593 = vmatpush1.msra.mxu0 0.0
  %594 = vmatprep.subr.mxu0 0.0
  %595 = vmatpush1.msra.mxu0 0.0
  %596 = vmatprep.subr.mxu0 0.0
  %597 = vmatpush1.msra.mxu0 0.0
  %598 = vmatprep.subr.mxu0 0.0
  %599 = vmatpush1.msra.mxu0 0.0
  %600 = vmatprep.subr.mxu0 0.0
  %601 = vmatpush1.msra.mxu0 0.0
  %602 = vmatprep.subr.mxu0 0.0
  %603 = vmatpush1.msra.mxu0 0.0
  %604 = vmatprep.subr.mxu0 0.0
  %605 = vmatpush1.msra.mxu0 0.0
  %606 = vmatprep.subr.mxu0 0.0
  %607 = vmatpush1.msra.mxu0 0.0
  %608 = vmatprep.subr.mxu0 0.0
  %609 = vmatpush1.msra.mxu0 0.0
  %610 = vmatprep.subr.mxu0 0.0
  %611 = vmatpush1.msra.mxu0 0.0
  %612 = vmatprep.subr.mxu0 0.0
  %613 = vmatpush1.msra.mxu0 0.0
  %614 = vmatprep.subr.mxu0 0.0
  %615 = vmatpush1.msra.mxu0 0.0
  %616 = vmatprep.mubr.f32.mxu0 0.0
  %617 = vmatmul.mubr.f32.gmra.mrb[0].mxu0 %v547
  %v618 = vpop.f32.mrb[0].mxu0
  %v619 = vadd.f32 0.0, %v618
  %v620 = vpop.f32.mrb[0].mxu0
  %621 = vmatprep.mubr.f32.mxu0 0.0
  %622 = vmatmul.mubr.f32.gmra.mrb[0].mxu0 %v550
  %v623 = vpop.f32.mrb[0].mxu0
  %v624 = vadd.f32 0.0, %v623
  %v625 = vpop.f32.mrb[0].mxu0
  %626 = vdwg.mxu0
  %v627 = vld [vmem:[%s2] sm:$0xff]
  %628 = vmatprep.subr.mxu0 0.0
  %629 = vmatpush1.msra.mxu0 %v619
  %630 = vmatprep.subr.mxu0 0.0
  %631 = vmatpush1.msra.mxu0 %v624
  %632 = vmatprep.subr.mxu0 0.0
  %633 = vmatpush1.msra.mxu0 0.0
  %634 = vmatprep.subr.mxu0 0.0
  %635 = vmatpush1.msra.mxu0 0.0
  %636 = vmatprep.subr.mxu0 0.0
  %637 = vmatpush1.msra.mxu0 0.0
  %638 = vmatprep.subr.mxu0 0.0
  %639 = vmatpush1.msra.mxu0 0.0
  %640 = vmatprep.subr.mxu0 0.0
  %641 = vmatpush1.msra.mxu0 0.0
  %642 = vmatprep.subr.mxu0 0.0
  %643 = vmatpush1.msra.mxu0 0.0
  %644 = vmatprep.subr.mxu0 0.0
  %645 = vmatpush1.msra.mxu0 0.0
  %646 = vmatprep.subr.mxu0 0.0
  %647 = vmatpush1.msra.mxu0 0.0
  %648 = vmatprep.subr.mxu0 0.0
  %649 = vmatpush1.msra.mxu0 0.0
  %650 = vmatprep.subr.mxu0 0.0
  %651 = vmatpush1.msra.mxu0 0.0
  %652 = vmatprep.subr.mxu0 0.0
  %653 = vmatpush1.msra.mxu0 0.0
  %654 = vmatprep.subr.mxu0 0.0
  %655 = vmatpush1.msra.mxu0 0.0
  %656 = vmatprep.subr.mxu0 0.0
  %657 = vmatpush1.msra.mxu0 0.0
  %658 = vmatprep.subr.mxu0 0.0
  %659 = vmatpush1.msra.mxu0 0.0
  %660 = vmatprep.subr.mxu0 0.0
  %661 = vmatpush1.msra.mxu0 0.0
  %662 = vmatprep.subr.mxu0 0.0
  %663 = vmatpush1.msra.mxu0 0.0
  %664 = vmatprep.subr.mxu0 0.0
  %665 = vmatpush1.msra.mxu0 0.0
  %666 = vmatprep.subr.mxu0 0.0
  %667 = vmatpush1.msra.mxu0 0.0
  %668 = vmatprep.subr.mxu0 0.0
  %669 = vmatpush1.msra.mxu0 0.0
  %670 = vmatprep.subr.mxu0 0.0
  %671 = vmatpush1.msra.mxu0 0.0
  %672 = vmatprep.subr.mxu0 0.0
  %673 = vmatpush1.msra.mxu0 0.0
  %674 = vmatprep.subr.mxu0 0.0
  %675 = vmatpush1.msra.mxu0 0.0
  %676 = vmatprep.subr.mxu0 0.0
  %677 = vmatpush1.msra.mxu0 0.0
  %678 = vmatprep.subr.mxu0 0.0
  %679 = vmatpush1.msra.mxu0 0.0
  %680 = vmatprep.subr.mxu0 0.0
  %681 = vmatpush1.msra.mxu0 0.0
  %682 = vmatprep.subr.mxu0 0.0
  %683 = vmatpush1.msra.mxu0 0.0
  %684 = vmatprep.subr.mxu0 0.0
  %685 = vmatpush1.msra.mxu0 0.0
  %686 = vmatprep.subr.mxu0 0.0
  %687 = vmatpush1.msra.mxu0 0.0
  %688 = vmatprep.subr.mxu0 0.0
  %689 = vmatpush1.msra.mxu0 0.0
  %690 = vmatprep.subr.mxu0 0.0
  %691 = vmatpush1.msra.mxu0 0.0
  %692 = vmatprep.mubr.f32.mxu0 0.0
  %693 = vmatmul.mubr.f32.gmra.mrb[0].mxu0 %v547
  %v694 = vpop.f32.mrb[0].mxu0
  %v695 = vadd.f32 0.0, %v694
  %v696 = vpop.f32.mrb[0].mxu0
  %697 = vmatprep.mubr.f32.mxu0 0.0
  %698 = vmatmul.mubr.f32.gmra.mrb[0].mxu0 %v550
  %v699 = vpop.f32.mrb[0].mxu0
  %v700 = vadd.f32 0.0, %v699
  %v701 = vpop.f32.mrb[0].mxu0
  %702 = vdwg.mxu0
  %v703 = vld [vmem:[%s181] sm:$0xff]
  %v705 = vsel %vm183, %v695, 0
  %v708 = vsel %vm183, %v700, 0
  %710 = vmatprep.subr.mxu0 0.0
  %711 = vmatpush1.msra.mxu0 %v703
  %712 = vmatprep.subr.mxu0 0.0
  %713 = vmatpush1.msra.mxu0 0.0
  %714 = vmatprep.subr.mxu0 0.0
  %715 = vmatpush1.msra.mxu0 0.0
  %716 = vmatprep.subr.mxu0 0.0
  %717 = vmatpush1.msra.mxu0 0.0
  %718 = vmatprep.subr.mxu0 0.0
  %719 = vmatpush1.msra.mxu0 0.0
  %720 = vmatprep.subr.mxu0 0.0
  %721 = vmatpush1.msra.mxu0 0.0
  %722 = vmatprep.subr.mxu0 0.0
  %723 = vmatpush1.msra.mxu0 0.0
  %724 = vmatprep.subr.mxu0 0.0
  %725 = vmatpush1.msra.mxu0 0.0
  %726 = vmatprep.subr.mxu0 0.0
  %727 = vmatpush1.msra.mxu0 0.0
  %728 = vmatprep.subr.mxu0 0.0
  %729 = vmatpush1.msra.mxu0 0.0
  %730 = vmatprep.subr.mxu0 0.0
  %731 = vmatpush1.msra.mxu0 0.0
  %732 = vmatprep.subr.mxu0 0.0
  %733 = vmatpush1.msra.mxu0 0.0
  %734 = vmatprep.subr.mxu0 0.0
  %735 = vmatpush1.msra.mxu0 0.0
  %736 = vmatprep.subr.mxu0 0.0
  %737 = vmatpush1.msra.mxu0 0.0
  %738 = vmatprep.subr.mxu0 0.0
  %739 = vmatpush1.msra.mxu0 0.0
  %740 = vmatprep.subr.mxu0 0.0
  %741 = vmatpush1.msra.mxu0 0.0
  %742 = vmatprep.subr.mxu0 0.0
  %743 = vmatpush1.msra.mxu0 0.0
  %744 = vmatprep.subr.mxu0 0.0
  %745 = vmatpush1.msra.mxu0 0.0
  %746 = vmatprep.subr.mxu0 0.0
  %747 = vmatpush1.msra.mxu0 0.0
  %748 = vmatprep.subr.mxu0 0.0
  %749 = vmatpush1.msra.mxu0 0.0
  %750 = vmatprep.subr.mxu0 0.0
  %751 = vmatpush1.msra.mxu0 0.0
  %752 = vmatprep.subr.mxu0 0.0
  %753 = vmatpush1.msra.mxu0 0.0
  %754 = vmatprep.subr.mxu0 0.0
  %755 = vmatpush1.msra.mxu0 0.0
  %756 = vmatprep.subr.mxu0 0.0
  %757 = vmatpush1.msra.mxu0 0.0
  %758 = vmatprep.subr.mxu0 0.0
  %759 = vmatpush1.msra.mxu0 0.0
  %760 = vmatprep.subr.mxu0 0.0
  %761 = vmatpush1.msra.mxu0 0.0
  %762 = vmatprep.subr.mxu0 0.0
  %763 = vmatpush1.msra.mxu0 0.0
  %764 = vmatprep.subr.mxu0 0.0
  %765 = vmatpush1.msra.mxu0 0.0
  %766 = vmatprep.subr.mxu0 0.0
  %767 = vmatpush1.msra.mxu0 0.0
  %768 = vmatprep.subr.mxu0 0.0
  %769 = vmatpush1.msra.mxu0 0.0
  %770 = vmatprep.subr.mxu0 0.0
  %771 = vmatpush1.msra.mxu0 0.0
  %772 = vmatprep.subr.mxu0 0.0
  %773 = vmatpush1.msra.mxu0 0.0
  %774 = vmatprep.mubr.f32.mxu0 0.0
  %775 = vmatmul.mubr.f32.gmra.mrb[0].mxu0 %v705
  %v776 = vpop.f32.mrb[0].mxu0
  %v777 = vadd.f32 0.0, %v776
  %v778 = vpop.f32.mrb[0].mxu0
  %779 = vmatprep.mubr.f32.mxu0 0.0
  %780 = vmatmul.mubr.f32.gmra.mrb[0].mxu0 %v708
  %v781 = vpop.f32.mrb[0].mxu0
  %v782 = vadd.f32 0.0, %v781
  %v783 = vpop.f32.mrb[0].mxu0
  %784 = vdwg.mxu0
  %v786 = vsel %vm183, %v619, 0
  %v789 = vsel %vm183, %v624, 0
  %791 = vmatprep.subr.mxu0 0.0
  %792 = vmatpush1.msra.mxu0 %v627
  %793 = vmatprep.subr.mxu0 0.0
  %794 = vmatpush1.msra.mxu0 0.0
  %795 = vmatprep.subr.mxu0 0.0
  %796 = vmatpush1.msra.mxu0 0.0
  %797 = vmatprep.subr.mxu0 0.0
  %798 = vmatpush1.msra.mxu0 0.0
  %799 = vmatprep.subr.mxu0 0.0
  %800 = vmatpush1.msra.mxu0 0.0
  %801 = vmatprep.subr.mxu0 0.0
  %802 = vmatpush1.msra.mxu0 0.0
  %803 = vmatprep.subr.mxu0 0.0
  %804 = vmatpush1.msra.mxu0 0.0
  %805 = vmatprep.subr.mxu0 0.0
  %806 = vmatpush1.msra.mxu0 0.0
  %807 = vmatprep.subr.mxu0 0.0
  %808 = vmatpush1.msra.mxu0 0.0
  %809 = vmatprep.subr.mxu0 0.0
  %810 = vmatpush1.msra.mxu0 0.0
  %811 = vmatprep.subr.mxu0 0.0
  %812 = vmatpush1.msra.mxu0 0.0
  %813 = vmatprep.subr.mxu0 0.0
  %814 = vmatpush1.msra.mxu0 0.0
  %815 = vmatprep.subr.mxu0 0.0
  %816 = vmatpush1.msra.mxu0 0.0
  %817 = vmatprep.subr.mxu0 0.0
  %818 = vmatpush1.msra.mxu0 0.0
  %819 = vmatprep.subr.mxu0 0.0
  %820 = vmatpush1.msra.mxu0 0.0
  %821 = vmatprep.subr.mxu0 0.0
  %822 = vmatpush1.msra.mxu0 0.0
  %823 = vmatprep.subr.mxu0 0.0
  %824 = vmatpush1.msra.mxu0 0.0
  %825 = vmatprep.subr.mxu0 0.0
  %826 = vmatpush1.msra.mxu0 0.0
  %827 = vmatprep.subr.mxu0 0.0
  %828 = vmatpush1.msra.mxu0 0.0
  %829 = vmatprep.subr.mxu0 0.0
  %830 = vmatpush1.msra.mxu0 0.0
  %831 = vmatprep.subr.mxu0 0.0
  %832 = vmatpush1.msra.mxu0 0.0
  %833 = vmatprep.subr.mxu0 0.0
  %834 = vmatpush1.msra.mxu0 0.0
  %835 = vmatprep.subr.mxu0 0.0
  %836 = vmatpush1.msra.mxu0 0.0
  %837 = vmatprep.subr.mxu0 0.0
  %838 = vmatpush1.msra.mxu0 0.0
  %839 = vmatprep.subr.mxu0 0.0
  %840 = vmatpush1.msra.mxu0 0.0
  %841 = vmatprep.subr.mxu0 0.0
  %842 = vmatpush1.msra.mxu0 0.0
  %843 = vmatprep.subr.mxu0 0.0
  %844 = vmatpush1.msra.mxu0 0.0
  %845 = vmatprep.subr.mxu0 0.0
  %846 = vmatpush1.msra.mxu0 0.0
  %847 = vmatprep.subr.mxu0 0.0
  %848 = vmatpush1.msra.mxu0 0.0
  %849 = vmatprep.subr.mxu0 0.0
  %850 = vmatpush1.msra.mxu0 0.0
  %851 = vmatprep.subr.mxu0 0.0
  %852 = vmatpush1.msra.mxu0 0.0
  %853 = vmatprep.subr.mxu0 0.0
  %854 = vmatpush1.msra.mxu0 0.0
  %855 = vmatprep.mubr.f32.mxu0 0.0
  %856 = vmatmul.mubr.f32.gmra.mrb[0].mxu0 %v786
  %v857 = vpop.f32.mrb[0].mxu0
  %v858 = vadd.f32 %v777, %v857
  %v859 = vpop.f32.mrb[0].mxu0
  %860 = vmatprep.mubr.f32.mxu0 0.0
  %861 = vmatmul.mubr.f32.gmra.mrb[0].mxu0 %v789
  %v862 = vpop.f32.mrb[0].mxu0
  %v863 = vadd.f32 %v782, %v862
  %v864 = vpop.f32.mrb[0].mxu0
  %865 = vdwg.mxu0
  %866 = vmatprep.subr.mxu0 0.0
  %867 = vmatpush1.msra.mxu0 %v695
  %868 = vmatprep.subr.mxu0 0.0
  %869 = vmatpush1.msra.mxu0 %v700
  %870 = vmatprep.subr.mxu0 0.0
  %871 = vmatpush1.msra.mxu0 0.0
  %872 = vmatprep.subr.mxu0 0.0
  %873 = vmatpush1.msra.mxu0 0.0
  %874 = vmatprep.subr.mxu0 0.0
  %875 = vmatpush1.msra.mxu0 0.0
  %876 = vmatprep.subr.mxu0 0.0
  %877 = vmatpush1.msra.mxu0 0.0
  %878 = vmatprep.subr.mxu0 0.0
  %879 = vmatpush1.msra.mxu0 0.0
  %880 = vmatprep.subr.mxu0 0.0
  %881 = vmatpush1.msra.mxu0 0.0
  %882 = vmatprep.subr.mxu0 0.0
  %883 = vmatpush1.msra.mxu0 0.0
  %884 = vmatprep.subr.mxu0 0.0
  %885 = vmatpush1.msra.mxu0 0.0
  %886 = vmatprep.subr.mxu0 0.0
  %887 = vmatpush1.msra.mxu0 0.0
  %888 = vmatprep.subr.mxu0 0.0
  %889 = vmatpush1.msra.mxu0 0.0
  %890 = vmatprep.subr.mxu0 0.0
  %891 = vmatpush1.msra.mxu0 0.0
  %892 = vmatprep.subr.mxu0 0.0
  %893 = vmatpush1.msra.mxu0 0.0
  %894 = vmatprep.subr.mxu0 0.0
  %895 = vmatpush1.msra.mxu0 0.0
  %896 = vmatprep.subr.mxu0 0.0
  %897 = vmatpush1.msra.mxu0 0.0
  %898 = vmatprep.subr.mxu0 0.0
  %899 = vmatpush1.msra.mxu0 0.0
  %900 = vmatprep.subr.mxu0 0.0
  %901 = vmatpush1.msra.mxu0 0.0
  %902 = vmatprep.subr.mxu0 0.0
  %903 = vmatpush1.msra.mxu0 0.0
  %904 = vmatprep.subr.mxu0 0.0
  %905 = vmatpush1.msra.mxu0 0.0
  %906 = vmatprep.subr.mxu0 0.0
  %907 = vmatpush1.msra.mxu0 0.0
  %908 = vmatprep.subr.mxu0 0.0
  %909 = vmatpush1.msra.mxu0 0.0
  %910 = vmatprep.subr.mxu0 0.0
  %911 = vmatpush1.msra.mxu0 0.0
  %912 = vmatprep.subr.mxu0 0.0
  %913 = vmatpush1.msra.mxu0 0.0
  %914 = vmatprep.subr.mxu0 0.0
  %915 = vmatpush1.msra.mxu0 0.0
  %916 = vmatprep.subr.mxu0 0.0
  %917 = vmatpush1.msra.mxu0 0.0
  %918 = vmatprep.subr.mxu0 0.0
  %919 = vmatpush1.msra.mxu0 0.0
  %920 = vmatprep.subr.mxu0 0.0
  %921 = vmatpush1.msra.mxu0 0.0
  %922 = vmatprep.subr.mxu0 0.0
  %923 = vmatpush1.msra.mxu0 0.0
  %924 = vmatprep.subr.mxu0 0.0
  %925 = vmatpush1.msra.mxu0 0.0
  %926 = vmatprep.subr.mxu0 0.0
  %927 = vmatpush1.msra.mxu0 0.0
  %928 = vmatprep.subr.mxu0 0.0
  %929 = vmatpush1.msra.mxu0 0.0
  %930 = vmatprep.mubr.f32.mxu0 0.0
  %931 = vmatmul.mubr.f32.gmra.mrb[0].mxu0 %v547
  %v932 = vpop.f32.mrb[0].mxu0
  %v933 = vadd.f32 0.0, %v932
  %v934 = vpop.f32.mrb[0].mxu0
  %935 = vmatprep.mubr.f32.mxu0 0.0
  %936 = vmatmul.mubr.f32.gmra.mrb[0].mxu0 %v550
  %v937 = vpop.f32.mrb[0].mxu0
  %v938 = vadd.f32 0.0, %v937
  %v939 = vpop.f32.mrb[0].mxu0
  %940 = vdwg.mxu0
  %v941 = vld [vmem:[%s421] sm:$0xff]
  %v943 = vsel %vm183, %v933, 0
  %v946 = vsel %vm183, %v938, 0
  %948 = vmatprep.subr.mxu0 0.0
  %949 = vmatpush1.msra.mxu0 %v941
  %950 = vmatprep.subr.mxu0 0.0
  %951 = vmatpush1.msra.mxu0 0.0
  %952 = vmatprep.subr.mxu0 0.0
  %953 = vmatpush1.msra.mxu0 0.0
  %954 = vmatprep.subr.mxu0 0.0
  %955 = vmatpush1.msra.mxu0 0.0
  %956 = vmatprep.subr.mxu0 0.0
  %957 = vmatpush1.msra.mxu0 0.0
  %958 = vmatprep.subr.mxu0 0.0
  %959 = vmatpush1.msra.mxu0 0.0
  %960 = vmatprep.subr.mxu0 0.0
  %961 = vmatpush1.msra.mxu0 0.0
  %962 = vmatprep.subr.mxu0 0.0
  %963 = vmatpush1.msra.mxu0 0.0
  %964 = vmatprep.subr.mxu0 0.0
  %965 = vmatpush1.msra.mxu0 0.0
  %966 = vmatprep.subr.mxu0 0.0
  %967 = vmatpush1.msra.mxu0 0.0
  %968 = vmatprep.subr.mxu0 0.0
  %969 = vmatpush1.msra.mxu0 0.0
  %970 = vmatprep.subr.mxu0 0.0
  %971 = vmatpush1.msra.mxu0 0.0
  %972 = vmatprep.subr.mxu0 0.0
  %973 = vmatpush1.msra.mxu0 0.0
  %974 = vmatprep.subr.mxu0 0.0
  %975 = vmatpush1.msra.mxu0 0.0
  %976 = vmatprep.subr.mxu0 0.0
  %977 = vmatpush1.msra.mxu0 0.0
  %978 = vmatprep.subr.mxu0 0.0
  %979 = vmatpush1.msra.mxu0 0.0
  %980 = vmatprep.subr.mxu0 0.0
  %981 = vmatpush1.msra.mxu0 0.0
  %982 = vmatprep.subr.mxu0 0.0
  %983 = vmatpush1.msra.mxu0 0.0
  %984 = vmatprep.subr.mxu0 0.0
  %985 = vmatpush1.msra.mxu0 0.0
  %986 = vmatprep.subr.mxu0 0.0
  %987 = vmatpush1.msra.mxu0 0.0
  %988 = vmatprep.subr.mxu0 0.0
  %989 = vmatpush1.msra.mxu0 0.0
  %990 = vmatprep.subr.mxu0 0.0
  %991 = vmatpush1.msra.mxu0 0.0
  %992 = vmatprep.subr.mxu0 0.0
  %993 = vmatpush1.msra.mxu0 0.0
  %994 = vmatprep.subr.mxu0 0.0
  %995 = vmatpush1.msra.mxu0 0.0
  %996 = vmatprep.subr.mxu0 0.0
  %997 = vmatpush1.msra.mxu0 0.0
  %998 = vmatprep.subr.mxu0 0.0
  %999 = vmatpush1.msra.mxu0 0.0
  %1000 = vmatprep.subr.mxu0 0.0
  %1001 = vmatpush1.msra.mxu0 0.0
  %1002 = vmatprep.subr.mxu0 0.0
  %1003 = vmatpush1.msra.mxu0 0.0
  %1004 = vmatprep.subr.mxu0 0.0
  %1005 = vmatpush1.msra.mxu0 0.0
  %1006 = vmatprep.subr.mxu0 0.0
  %1007 = vmatpush1.msra.mxu0 0.0
  %1008 = vmatprep.subr.mxu0 0.0
  %1009 = vmatpush1.msra.mxu0 0.0
  %1010 = vmatprep.subr.mxu0 0.0
  %1011 = vmatpush1.msra.mxu0 0.0
  %1012 = vmatprep.mubr.f32.mxu0 0.0
  %1013 = vmatmul.mubr.f32.gmra.mrb[0].mxu0 %v943
  %v1014 = vpop.f32.mrb[0].mxu0
  %v1015 = vadd.f32 0.0, %v1014
  %v1016 = vpop.f32.mrb[0].mxu0
  %1017 = vmatprep.mubr.f32.mxu0 0.0
  %1018 = vmatmul.mubr.f32.gmra.mrb[0].mxu0 %v946
  %v1019 = vpop.f32.mrb[0].mxu0
  %v1020 = vadd.f32 0.0, %v1019
  %v1021 = vpop.f32.mrb[0].mxu0
  %1022 = vdwg.mxu0
  %v1023 = vadd.f32 %v858, %v1015
  %v1024 = vadd.f32 %v863, %v1020
  %v1025 = vld [vmem:[%s3] sm:$0x1]
  %v1027 = vlaneseq
  %v1028 = vshrl.u32 %v1027, 7
  %v1029 = vsub.s32 0, %v1028
  %v1030 = vrot.slane %v1025, %v1029
  %v1032 = vadd.f32 %v1023, %v1030
  %v1033 = vadd.f32 %v1024, %v1030
  %s1034 = scalar_lea.vmem %s4, 16
  %1035 = vst.msk [vmem:[%s1034] sm:$0xff] %vm515, %v1032
  %1036 = vst.msk [vmem:[%s1034 + $0x8] sm:$0xff] %vm515, %v1033
  %v1037 = vsel %vm515, %v1032, 0.0
  %v1038 = vsel %vm515, %v1033, 0.0
  %v1039 = vadd.f32 %v1037, %v1038
  %v1040 = vrot.slane %v1039, 4
  %v1041 = vadd.f32 %v1039, %v1040
  %v1042 = vrot.slane %v1041, 2
  %v1043 = vadd.f32 %v1041, %v1042
  %v1044 = vrot.slane %v1043, 1
  %v1045 = vadd.f32 %v1043, %v1044
  %v1046 = vadd.f32 %v527, %v1045
  %v1047 = vmul.f32 %v1032, %v1032
  %v1048 = vmul.f32 %v1033, %v1033
  %v1049 = vsel %vm515, %v1047, 0.0
  %v1050 = vsel %vm515, %v1048, 0.0
  %v1051 = vadd.f32 %v1049, %v1050
  %v1052 = vrot.slane %v1051, 4
  %v1053 = vadd.f32 %v1051, %v1052
  %v1054 = vrot.slane %v1053, 2
  %v1055 = vadd.f32 %v1053, %v1054
  %v1056 = vrot.slane %v1055, 1
  %v1057 = vadd.f32 %v1055, %v1056
  %v1058 = vadd.f32 %v539, %v1057
  %vm1059 = vcmask 1040384
  %v1060 = vsel %vm1059, %v1046, %v1058
  %vm1061 = vcmask 254976
  %1062 = vst.msk [vmem:[%s5] sm:$0x3] %vm1061, %v1060
  // Predicated region
  $region18: #{mpnn_mk_v2_forward.2} parent=0 // pred_check
    _
  $region19: #{mpnn_mk_v2_forward.2} parent=0 // pred_check_branch
    %1064 = sbr.rel (0) target = $region21
  $region20: #{mpnn_mk_v2_forward.2} parent=0 // pred_region
    _
  $region21: #{mpnn_mk_v2_forward.2} parent=0 // pred_fallthru
    _
  // Predicated region
  $region22: #{mpnn_mk_v2_forward.2} parent=0 // pred_check
    _
  $region23: #{mpnn_mk_v2_forward.2} parent=0 // pred_check_branch
    %1066 = sbr.rel (0) target = $region25
  $region24: #{mpnn_mk_v2_forward.2} parent=0 // pred_region
    _
  $region25: #{mpnn_mk_v2_forward.2} parent=0 // pred_fallthru
    _
  // Predicated region
  $region26: #{mpnn_mk_v2_forward.2} parent=0 // pred_check
    _
  $region27: #{mpnn_mk_v2_forward.2} parent=0 // pred_check_branch
    %1068 = sbr.rel (0) target = $region29
  $region28: #{mpnn_mk_v2_forward.2} parent=0 // pred_region
    _
  $region29: #{mpnn_mk_v2_forward.2} parent=0 // pred_fallthru
    _
  // Predicated region
  $region30: #{mpnn_mk_v2_forward.2} parent=0 // pred_check
    _
  $region31: #{mpnn_mk_v2_forward.2} parent=0 // pred_check_branch
    %1070 = sbr.rel (0) target = $region33
  $region32: #{mpnn_mk_v2_forward.2} parent=0 // pred_region
    _
  $region33: #{mpnn_mk_v2_forward.2} parent=0 // pred_fallthru
    _

</llo_original>
